<compile_context>
chip_gen: v6e
topology: v6e:2x2x1
jax: 0.10.0
libtpu: 0.0.40
codegen_flags: <defaults>
</compile_context>

<pallas_src>
import jax
import jax.numpy as jnp
from jax.experimental import pallas as pl
from jax.experimental.pallas import tpu as pltpu


def _make_kernel(H, W):
    Wp = W + 2          # padded width kept inside the flattened spatial axis
    Q = H * Wp          # flattened output extent (includes 2 junk cols / row)

    def kernel(x_ref, w1_ref, b1_ref, wo_ref, o_ref):
        # x_ref : (Cin, L)        zero-padded, spatially flattened input
        # w1_ref: (9, Cmid, Cin)  BN-folded 3x3 taps, tap index k = a*3 + b
        # b1_ref: (Cmid, 1)       BN-folded bias
        # wo_ref: (nc, Cmid)      1x1 conv_out weight
        # o_ref : (nc, Q)         flattened N,C,(H*(W+2)) output (lane-dense)
        x = x_ref[...]
        acc = None
        for a in range(3):
            for b in range(3):
                off = a * Wp + b
                xs = x[:, off:off + Q]                      # (Cin, Q) static lane slice
                part = jnp.dot(w1_ref[a * 3 + b], xs,
                               preferred_element_type=jnp.float32)
                acc = part if acc is None else acc + part
        y = jnp.maximum(acc + b1_ref[...], 0.0)             # (Cmid, Q)
        o_ref[...] = jnp.dot(wo_ref[...], y,
                             preferred_element_type=jnp.float32
                             ).astype(o_ref.dtype)

    return kernel


def bisenet_output_forward(x, params):
    """x: (N, Cin, H, W) float32 NCHW. Returns (N, n_classes, H, W) NCHW."""
    N, Cin, H, W = x.shape
    w1 = params["w1_taps"]          # (9, Cmid, Cin)
    b1 = params["b1"]               # (Cmid, 1)
    wo = params["w_out"]            # (nc, Cmid)
    Cmid = w1.shape[1]
    nc = wo.shape[0]
    Wp = W + 2
    Q = H * Wp
    L = (H + 3) * Wp                # H padded (1 top, 2 bottom) so every tap slice is in-bounds

    # Single zero-pad = the only extra pass over the input; the reshape that
    # flattens the padded spatial dims is a free metadata change in XLA.
    xp = jnp.pad(x, ((0, 0), (0, 0), (1, 2), (1, 1)))
    xf = xp.reshape(N, Cin, L)

    out_flat = pl.pallas_call(
        _make_kernel(H, W),
        out_shape=jax.ShapeDtypeStruct((N, nc, Q), jnp.float32),
        grid_spec=pltpu.PrefetchScalarGridSpec(
            num_scalar_prefetch=0,
            grid=(N,),
            in_specs=[
                pl.BlockSpec((pl.Squeezed(), Cin, L), lambda n: (n, 0, 0)),
                pl.BlockSpec((9, Cmid, Cin), lambda n: (0, 0, 0)),
                pl.BlockSpec((Cmid, 1), lambda n: (0, 0)),
                pl.BlockSpec((nc, Cmid), lambda n: (0, 0)),
            ],
            out_specs=pl.BlockSpec((pl.Squeezed(), nc, Q), lambda n: (n, 0, 0)),
        ),
        compiler_params=pltpu.CompilerParams(
            dimension_semantics=("parallel",),
            vmem_limit_bytes=48 * 1024 * 1024,
        ),
    )(xf, w1, b1, wo)

    # Strip the 2 junk columns per row; the output is the smallest tensor, so
    # this slice is far cheaper than the transposes it replaces.
    return out_flat.reshape(N, nc, H, Wp)[:, :, :, :W]


def make_raw_params(key, in_chan, mid_chan, n_classes):
    """Deterministic synthetic params matching the PyTorch module's shapes."""
    k1, k2, k3, k4, k5, k6 = jax.random.split(key, 6)
    w_conv = 0.1 * jax.random.normal(k1, (mid_chan, in_chan, 3, 3), jnp.float32)
    gamma = 1.0 + 0.1 * jax.random.normal(k2, (mid_chan,), jnp.float32)
    beta = 0.1 * jax.random.normal(k3, (mid_chan,), jnp.float32)
    running_mean = 0.1 * jax.random.normal(k4, (mid_chan,), jnp.float32)
    running_var = jnp.abs(1.0 + 0.1 * jax.random.normal(k5, (mid_chan,), jnp.float32))
    w_out = 0.1 * jax.random.normal(k6, (n_classes, mid_chan, 1, 1), jnp.float32)
    return {"w_conv": w_conv, "gamma": gamma, "beta": beta,
            "running_mean": running_mean, "running_var": running_var,
            "w_out": w_out}


def fold_params(raw, eps=1e-5):
    """Fold eval-mode BN into the 3x3 conv and lay out weights for the kernel."""
    scale = raw["gamma"] / jnp.sqrt(raw["running_var"] + eps)   # (Cmid,)
    bias = raw["beta"] - raw["running_mean"] * scale            # (Cmid,)
    w_folded = raw["w_conv"] * scale[:, None, None, None]       # (Cmid, Cin, 3, 3)
    Cmid, Cin = w_folded.shape[0], w_folded.shape[1]
    w1_taps = jnp.transpose(w_folded, (2, 3, 0, 1)).reshape(9, Cmid, Cin)
    nc = raw["w_out"].shape[0]
    return {"w1_taps": w1_taps,
            "b1": bias.reshape(Cmid, 1),
            "w_out": raw["w_out"].reshape(nc, Cmid)}


def reference_forward(x, raw, eps=1e-5):
    """Pure-JAX reference mirroring the PyTorch forward (eval-mode BN)."""
    y = jax.lax.conv_general_dilated(
        x, raw["w_conv"], window_strides=(1, 1), padding=((1, 1), (1, 1)),
        dimension_numbers=("NCHW", "OIHW", "NCHW"),
        precision=jax.lax.Precision.HIGHEST)
    scale = raw["gamma"] / jnp.sqrt(raw["running_var"] + eps)
    bias = raw["beta"] - raw["running_mean"] * scale
    y = y * scale[None, :, None, None] + bias[None, :, None, None]
    y = jnp.maximum(y, 0.0)
    out = jax.lax.conv_general_dilated(
        y, raw["w_out"], window_strides=(1, 1), padding="VALID",
        dimension_numbers=("NCHW", "OIHW", "NCHW"),
        precision=jax.lax.Precision.HIGHEST)
    return out


if __name__ == "__main__":
    key = jax.random.PRNGKey(0)
    kx, kp = jax.random.split(key)

    # Small shapes consistent with the module (in_chan, mid_chan, n_classes).
    N, in_chan, mid_chan, n_classes, H, W = 2, 32, 32, 8, 16, 16

    x = jax.random.normal(kx, (N, in_chan, H, W), jnp.float32)
    raw = make_raw_params(kp, in_chan, mid_chan, n_classes)
    params = fold_params(raw)

    out = bisenet_output_forward(x, params)
    out = jax.block_until_ready(out)

    ref = reference_forward(x, raw)
    assert out.shape == (N, n_classes, H, W)
    assert jnp.allclose(out, ref, atol=1e-3, rtol=1e-3), "mismatch vs reference"

    print("KERNEL_OK")
</pallas_src>

<mosaic_0001>
module attributes {stable_mosaic.version = 11 : i64} {
  func.func @kernel(%arg0: i32, %arg1: memref<1x32x342xf32, #tpu.memory_space<vmem>>, %arg2: memref<9x32x32xf32, #tpu.memory_space<vmem>>, %arg3: memref<32x1xf32, #tpu.memory_space<vmem>>, %arg4: memref<8x32xf32, #tpu.memory_space<vmem>>, %arg5: memref<1x8x288xf32, #tpu.memory_space<vmem>>) attributes {dimension_semantics = [#tpu.dimension_semantics<parallel>], iteration_bounds = array<i64: 2>, scalar_prefetch = 0 : i64, scratch_operands = 0 : i64, tpu.core_type = #tpu.core_type<tc>, window_params = [{transform_indices = @transform_0, window_bounds = array<i64: 1, 32, 342>}, {pipeline_mode = #tpu.pipeline_mode<synchronous>, transform_indices = @transform_1, window_bounds = array<i64: 9, 32, 32>}, {pipeline_mode = #tpu.pipeline_mode<synchronous>, transform_indices = @transform_2, window_bounds = array<i64: 32, 1>}, {pipeline_mode = #tpu.pipeline_mode<synchronous>, transform_indices = @transform_3, window_bounds = array<i64: 8, 32>}, {transform_indices = @transform_4, window_bounds = array<i64: 1, 8, 288>}]} {
    %c0 = arith.constant 0 : index
    %c0_0 = arith.constant 0 : index
    %c0_1 = arith.constant 0 : index
    %0 = vector.load %arg1[%c0, %c0_0, %c0_1] : memref<1x32x342xf32, #tpu.memory_space<vmem>>, vector<1x32x342xf32>
    %1 = vector.shape_cast %0 : vector<1x32x342xf32> to vector<32x342xf32>
    %2 = vector.extract_strided_slice %1 {offsets = [0, 0], sizes = [32, 288], strides = [1, 1]} : vector<32x342xf32> to vector<32x288xf32>
    %c0_2 = arith.constant 0 : index
    %c0_3 = arith.constant 0 : index
    %c0_4 = arith.constant 0 : index
    %3 = vector.load %arg2[%c0_2, %c0_3, %c0_4] : memref<9x32x32xf32, #tpu.memory_space<vmem>>, vector<1x32x32xf32>
    %4 = vector.shape_cast %3 : vector<1x32x32xf32> to vector<32x32xf32>
    %cst = arith.constant dense<0.000000e+00> : vector<32x288xf32>
    %5 = tpu.matmul %4, %2, %cst {dimension_numbers = #tpu.dot_dimension_numbers<[1], [0], [0], [1], [0, 0, 1, 1], [], []>} : vector<32x32xf32>, vector<32x288xf32>, vector<32x288xf32> -> vector<32x288xf32>
    %6 = vector.extract_strided_slice %1 {offsets = [0, 1], sizes = [32, 288], strides = [1, 1]} : vector<32x342xf32> to vector<32x288xf32>
    %c1 = arith.constant 1 : index
    %c0_5 = arith.constant 0 : index
    %c0_6 = arith.constant 0 : index
    %7 = vector.load %arg2[%c1, %c0_5, %c0_6] : memref<9x32x32xf32, #tpu.memory_space<vmem>>, vector<1x32x32xf32>
    %8 = vector.shape_cast %7 : vector<1x32x32xf32> to vector<32x32xf32>
    %cst_7 = arith.constant dense<0.000000e+00> : vector<32x288xf32>
    %9 = tpu.matmul %8, %6, %cst_7 {dimension_numbers = #tpu.dot_dimension_numbers<[1], [0], [0], [1], [0, 0, 1, 1], [], []>} : vector<32x32xf32>, vector<32x288xf32>, vector<32x288xf32> -> vector<32x288xf32>
    %10 = arith.addf %5, %9 : vector<32x288xf32>
    %11 = vector.extract_strided_slice %1 {offsets = [0, 2], sizes = [32, 288], strides = [1, 1]} : vector<32x342xf32> to vector<32x288xf32>
    %c2 = arith.constant 2 : index
    %c0_8 = arith.constant 0 : index
    %c0_9 = arith.constant 0 : index
    %12 = vector.load %arg2[%c2, %c0_8, %c0_9] : memref<9x32x32xf32, #tpu.memory_space<vmem>>, vector<1x32x32xf32>
    %13 = vector.shape_cast %12 : vector<1x32x32xf32> to vector<32x32xf32>
    %cst_10 = arith.constant dense<0.000000e+00> : vector<32x288xf32>
    %14 = tpu.matmul %13, %11, %cst_10 {dimension_numbers = #tpu.dot_dimension_numbers<[1], [0], [0], [1], [0, 0, 1, 1], [], []>} : vector<32x32xf32>, vector<32x288xf32>, vector<32x288xf32> -> vector<32x288xf32>
    %15 = arith.addf %10, %14 : vector<32x288xf32>
    %16 = vector.extract_strided_slice %1 {offsets = [0, 18], sizes = [32, 288], strides = [1, 1]} : vector<32x342xf32> to vector<32x288xf32>
    %c3 = arith.constant 3 : index
    %c0_11 = arith.constant 0 : index
    %c0_12 = arith.constant 0 : index
    %17 = vector.load %arg2[%c3, %c0_11, %c0_12] : memref<9x32x32xf32, #tpu.memory_space<vmem>>, vector<1x32x32xf32>
    %18 = vector.shape_cast %17 : vector<1x32x32xf32> to vector<32x32xf32>
    %cst_13 = arith.constant dense<0.000000e+00> : vector<32x288xf32>
    %19 = tpu.matmul %18, %16, %cst_13 {dimension_numbers = #tpu.dot_dimension_numbers<[1], [0], [0], [1], [0, 0, 1, 1], [], []>} : vector<32x32xf32>, vector<32x288xf32>, vector<32x288xf32> -> vector<32x288xf32>
    %20 = arith.addf %15, %19 : vector<32x288xf32>
    %21 = vector.extract_strided_slice %1 {offsets = [0, 19], sizes = [32, 288], strides = [1, 1]} : vector<32x342xf32> to vector<32x288xf32>
    %c4 = arith.constant 4 : index
    %c0_14 = arith.constant 0 : index
    %c0_15 = arith.constant 0 : index
    %22 = vector.load %arg2[%c4, %c0_14, %c0_15] : memref<9x32x32xf32, #tpu.memory_space<vmem>>, vector<1x32x32xf32>
    %23 = vector.shape_cast %22 : vector<1x32x32xf32> to vector<32x32xf32>
    %cst_16 = arith.constant dense<0.000000e+00> : vector<32x288xf32>
    %24 = tpu.matmul %23, %21, %cst_16 {dimension_numbers = #tpu.dot_dimension_numbers<[1], [0], [0], [1], [0, 0, 1, 1], [], []>} : vector<32x32xf32>, vector<32x288xf32>, vector<32x288xf32> -> vector<32x288xf32>
    %25 = arith.addf %20, %24 : vector<32x288xf32>
    %26 = vector.extract_strided_slice %1 {offsets = [0, 20], sizes = [32, 288], strides = [1, 1]} : vector<32x342xf32> to vector<32x288xf32>
    %c5 = arith.constant 5 : index
    %c0_17 = arith.constant 0 : index
    %c0_18 = arith.constant 0 : index
    %27 = vector.load %arg2[%c5, %c0_17, %c0_18] : memref<9x32x32xf32, #tpu.memory_space<vmem>>, vector<1x32x32xf32>
    %28 = vector.shape_cast %27 : vector<1x32x32xf32> to vector<32x32xf32>
    %cst_19 = arith.constant dense<0.000000e+00> : vector<32x288xf32>
    %29 = tpu.matmul %28, %26, %cst_19 {dimension_numbers = #tpu.dot_dimension_numbers<[1], [0], [0], [1], [0, 0, 1, 1], [], []>} : vector<32x32xf32>, vector<32x288xf32>, vector<32x288xf32> -> vector<32x288xf32>
    %30 = arith.addf %25, %29 : vector<32x288xf32>
    %31 = vector.extract_strided_slice %1 {offsets = [0, 36], sizes = [32, 288], strides = [1, 1]} : vector<32x342xf32> to vector<32x288xf32>
    %c6 = arith.constant 6 : index
    %c0_20 = arith.constant 0 : index
    %c0_21 = arith.constant 0 : index
    %32 = vector.load %arg2[%c6, %c0_20, %c0_21] : memref<9x32x32xf32, #tpu.memory_space<vmem>>, vector<1x32x32xf32>
    %33 = vector.shape_cast %32 : vector<1x32x32xf32> to vector<32x32xf32>
    %cst_22 = arith.constant dense<0.000000e+00> : vector<32x288xf32>
    %34 = tpu.matmul %33, %31, %cst_22 {dimension_numbers = #tpu.dot_dimension_numbers<[1], [0], [0], [1], [0, 0, 1, 1], [], []>} : vector<32x32xf32>, vector<32x288xf32>, vector<32x288xf32> -> vector<32x288xf32>
    %35 = arith.addf %30, %34 : vector<32x288xf32>
    %36 = vector.extract_strided_slice %1 {offsets = [0, 37], sizes = [32, 288], strides = [1, 1]} : vector<32x342xf32> to vector<32x288xf32>
    %c7 = arith.constant 7 : index
    %c0_23 = arith.constant 0 : index
    %c0_24 = arith.constant 0 : index
    %37 = vector.load %arg2[%c7, %c0_23, %c0_24] : memref<9x32x32xf32, #tpu.memory_space<vmem>>, vector<1x32x32xf32>
    %38 = vector.shape_cast %37 : vector<1x32x32xf32> to vector<32x32xf32>
    %cst_25 = arith.constant dense<0.000000e+00> : vector<32x288xf32>
    %39 = tpu.matmul %38, %36, %cst_25 {dimension_numbers = #tpu.dot_dimension_numbers<[1], [0], [0], [1], [0, 0, 1, 1], [], []>} : vector<32x32xf32>, vector<32x288xf32>, vector<32x288xf32> -> vector<32x288xf32>
    %40 = arith.addf %35, %39 : vector<32x288xf32>
    %41 = vector.extract_strided_slice %1 {offsets = [0, 38], sizes = [32, 288], strides = [1, 1]} : vector<32x342xf32> to vector<32x288xf32>
    %c8 = arith.constant 8 : index
    %c0_26 = arith.constant 0 : index
    %c0_27 = arith.constant 0 : index
    %42 = vector.load %arg2[%c8, %c0_26, %c0_27] : memref<9x32x32xf32, #tpu.memory_space<vmem>>, vector<1x32x32xf32>
    %43 = vector.shape_cast %42 : vector<1x32x32xf32> to vector<32x32xf32>
    %cst_28 = arith.constant dense<0.000000e+00> : vector<32x288xf32>
    %44 = tpu.matmul %43, %41, %cst_28 {dimension_numbers = #tpu.dot_dimension_numbers<[1], [0], [0], [1], [0, 0, 1, 1], [], []>} : vector<32x32xf32>, vector<32x288xf32>, vector<32x288xf32> -> vector<32x288xf32>
    %45 = arith.addf %40, %44 : vector<32x288xf32>
    %c0_29 = arith.constant 0 : index
    %c0_30 = arith.constant 0 : index
    %46 = vector.load %arg3[%c0_29, %c0_30] : memref<32x1xf32, #tpu.memory_space<vmem>>, vector<32x1xf32>
    %47 = vector.broadcast %46 : vector<32x1xf32> to vector<32x288xf32>
    %48 = arith.addf %45, %47 : vector<32x288xf32>
    %cst_31 = arith.constant 0.000000e+00 : f32
    %49 = vector.broadcast %cst_31 : f32 to vector<32x288xf32>
    %50 = arith.maximumf %48, %49 : vector<32x288xf32>
    %c0_32 = arith.constant 0 : index
    %c0_33 = arith.constant 0 : index
    %51 = vector.load %arg4[%c0_32, %c0_33] : memref<8x32xf32, #tpu.memory_space<vmem>>, vector<8x32xf32>
    %cst_34 = arith.constant dense<0.000000e+00> : vector<8x288xf32>
    %52 = tpu.matmul %51, %50, %cst_34 {dimension_numbers = #tpu.dot_dimension_numbers<[1], [0], [0], [1], [0, 0, 1, 1], [], []>} : vector<8x32xf32>, vector<32x288xf32>, vector<8x288xf32> -> vector<8x288xf32>
    %c0_35 = arith.constant 0 : index
    %c0_36 = arith.constant 0 : index
    %c0_37 = arith.constant 0 : index
    %53 = vector.load %arg5[%c0_35, %c0_36, %c0_37] : memref<1x8x288xf32, #tpu.memory_space<vmem>>, vector<1x8x288xf32>
    %54 = vector.shape_cast %53 : vector<1x8x288xf32> to vector<8x288xf32>
    %55 = vector.shape_cast %52 : vector<8x288xf32> to vector<1x8x288xf32>
    tpu.vector_store %arg5[%c0_35, %c0_36, %c0_37], %55 {strides = array<i32>} : memref<1x8x288xf32, #tpu.memory_space<vmem>>, vector<1x8x288xf32>,
    return
  }
  func.func @transform_0(%arg0: i32) -> (i32, i32, i32) {
    %c0_i32 = arith.constant 0 : i32
    %c0_i32_0 = arith.constant 0 : i32
    %c0_i32_1 = arith.constant 0 : i32
    return %arg0, %c0_i32, %c0_i32_0 : i32, i32, i32
  }
  func.func @transform_1(%arg0: i32) -> (i32, i32, i32) {
    %c0_i32 = arith.constant 0 : i32
    %c0_i32_0 = arith.constant 0 : i32
    %c0_i32_1 = arith.constant 0 : i32
    %c0_i32_2 = arith.constant 0 : i32
    return %c0_i32, %c0_i32_0, %c0_i32_1 : i32, i32, i32
  }
  func.func @transform_2(%arg0: i32) -> (i32, i32) {
    %c0_i32 = arith.constant 0 : i32
    %c0_i32_0 = arith.constant 0 : i32
    %c0_i32_1 = arith.constant 0 : i32
    return %c0_i32, %c0_i32_0 : i32, i32
  }
  func.func @transform_3(%arg0: i32) -> (i32, i32) {
    %c0_i32 = arith.constant 0 : i32
    %c0_i32_0 = arith.constant 0 : i32
    %c0_i32_1 = arith.constant 0 : i32
    return %c0_i32, %c0_i32_0 : i32, i32
  }
  func.func @transform_4(%arg0: i32) -> (i32, i32, i32) {
    %c0_i32 = arith.constant 0 : i32
    %c0_i32_0 = arith.constant 0 : i32
    %c0_i32_1 = arith.constant 0 : i32
    return %arg0, %c0_i32, %c0_i32_0 : i32, i32, i32
  }
}

</mosaic_0001>

<llo_original>
// kernel: tpu_custom_call.1
$region0: #{tpu_custom_call.1}
  #allocation0 [shape = 'u32[]', space=smem, size = 0x4, offset = 0x4, fixed_abs, tag = 'smem constant byte address 0x4 - core index']
  #allocation1 [shape = 'u32[144,128]{1,0:T(1,128)}', space=vmem, size = 0x12000, scoped, tag = 'internal scratch']
  %s0 = inlined_call_operand.hbm [shape: f32[2,32,342], index: 0, kind: input, shape index: {}]
  %s1 = inlined_call_operand.hbm [shape: f32[9,32,32], index: 1, kind: input, shape index: {}]
  %s2 = inlined_call_operand.vmem [shape: f32[32,1], index: 2, kind: input, shape index: {}]
  %s3 = inlined_call_operand.vmem [shape: f32[8,32], index: 3, kind: input, shape index: {}]
  %s4 = inlined_call_operand.hbm [shape: f32[2,8,288], index: 4, kind: output, shape index: {}]
  %s5 = sld [smem:[#allocation0]]
  $region57: #{tpu_custom_call.1} parent=0
    _
  %s7 = ssub.s32 1, %s5
  %s8 = scalar_select 0, %s7, %s5
  $region1: #{tpu_custom_call.1} parent=0
    #allocation2 [shape = 'u8[98304]{0}', space=vmem, size = 0x18000, scoped, tag = 'input window, operand 0']
    #allocation3 [shape = 's32[2]{0}', space=sflag, size = 0x8, scoped, tag = 'scoped memory for tpu_custom_call.1']
    #allocation4 [shape = 's32[2]{0}', space=sflag, size = 0x8, scoped, tag = 'scoped memory for tpu_custom_call.1']
    #allocation5 [shape = 'u8[147456]{0}', space=vmem, size = 0x24000, scoped, tag = 'input window, operand 1, single buffered']
    #allocation6 [shape = 's32[1]{0}', space=sflag, size = 0x4, scoped, tag = 'scoped memory for tpu_custom_call.1']
    #allocation7 [shape = 'u8[24576]{0}', space=vmem, size = 0x6000, scoped, tag = 'output window, operand 0']
    %9 = vsyncpa [#allocation3], 0
    %s10 = scalar_lea.sflag [#allocation3], 1
    %11 = vsyncpa %s10, 0
    %12 = vsyncpa [#allocation6], 0
    %13 = vsyncpa [#allocation4], 0
    %s14 = scalar_lea.sflag [#allocation4], 1
    %15 = vsyncpa %s14, 0
    loop: start=0, step=1, limit=4
    $region2: #{tpu_custom_call.1} parent=1 // loop_pre_header
      _
    $region3: #{tpu_custom_call.1} parent=1 // loop_header
      %s17 = sphi 0, %s21
      %p18 = scmp.ge.s32.totalorder %s17, 4
      %s27 = sphi 0, %s29
      %s30 = sphi 0, %s27
      %s31 = sphi 0, %s30
      %s47 = sphi 0, %s31
      %s51 = sphi 0, %s51
      %s53 = sphi 0, %s51
      %s54 = sphi 0, %s53
      %s68 = sphi 0, %s54
      %s72 = sphi 0, %s72
      %s74 = sphi 0, %s72
      %s75 = sphi 0, %s74
      %s89 = sphi 0, %s75
      %s93 = sphi 0, %s93
      %s95 = sphi 0, %s93
      %s96 = sphi 0, %s95
      %s110 = sphi 0, %s96
      %s116 = sphi 0, %s118
      %s119 = sphi 0, %s116
      %s120 = sphi 0, %s119
      %s136 = sphi 0, %s120
    $region4: #{tpu_custom_call.1} parent=1 // loop_header_branch
      %20 = sbr.rel (%p18) target = $region8
    $region5: #{tpu_custom_call.1} parent=1 // loop_body
      %s22 = ssub.s32 %s17, 1
      %s23 = ssub.s32 %s17, 2
      %s24 = sadd.s32 %s17, 1
      %s25 = ssub.s32 %s17, %s24
      %p26 = scmp.eq.s32.totalorder %s25, 0
      %s28 = sadd.s32 %s27, 1
      %s29 = scalar_select %p26, %s27, %s28
      %p32 = pneg %p26
      %p33 = scmp.eq.s32.totalorder %s17, 1
      %p34 = por %p32, %p33
      %p35 = scmp.ne.s32.totalorder %s27, %s30
      %p36 = scmp.eq.s32.totalorder %s17, 0
      %p37 = por %p35, %p36
      %p38 = scmp.ne.s32.totalorder %s27, %s30
      %p39 = scmp.eq.s32.totalorder %s22, 1
      %p40 = por %p38, %p39
      %p41 = scmp.ne.s32.totalorder %s30, %s31
      %p42 = scmp.eq.s32.totalorder %s22, 0
      %p43 = por %p41, %p42
      %p44 = scmp.ne.s32.totalorder %s30, %s31
      %p45 = scmp.eq.s32.totalorder %s23, 1
      %p46 = por %p44, %p45
      %p48 = scmp.ne.s32.totalorder %s31, %s47
      %p49 = scmp.eq.s32.totalorder %s23, 0
      %p50 = por %p48, %p49
      %s52 = sadd.s32 %s51, 1
      %p55 = scmp.eq.s32.totalorder %s17, 1
      %p56 = scmp.ne.s32.totalorder %s51, %s53
      %p57 = scmp.eq.s32.totalorder %s17, 0
      %p58 = por %p56, %p57
      %p59 = scmp.ne.s32.totalorder %s51, %s53
      %p60 = scmp.eq.s32.totalorder %s22, 1
      %p61 = por %p59, %p60
      %p62 = scmp.ne.s32.totalorder %s53, %s54
      %p63 = scmp.eq.s32.totalorder %s22, 0
      %p64 = por %p62, %p63
      %p65 = scmp.ne.s32.totalorder %s53, %s54
      %p66 = scmp.eq.s32.totalorder %s23, 1
      %p67 = por %p65, %p66
      %p69 = scmp.ne.s32.totalorder %s54, %s68
      %p70 = scmp.eq.s32.totalorder %s23, 0
      %p71 = por %p69, %p70
      %s73 = sadd.s32 %s72, 1
      %p76 = scmp.eq.s32.totalorder %s17, 1
      %p77 = scmp.ne.s32.totalorder %s72, %s74
      %p78 = scmp.eq.s32.totalorder %s17, 0
      %p79 = por %p77, %p78
      %p80 = scmp.ne.s32.totalorder %s72, %s74
      %p81 = scmp.eq.s32.totalorder %s22, 1
      %p82 = por %p80, %p81
      %p83 = scmp.ne.s32.totalorder %s74, %s75
      %p84 = scmp.eq.s32.totalorder %s22, 0
      %p85 = por %p83, %p84
      %p86 = scmp.ne.s32.totalorder %s74, %s75
      %p87 = scmp.eq.s32.totalorder %s23, 1
      %p88 = por %p86, %p87
      %p90 = scmp.ne.s32.totalorder %s75, %s89
      %p91 = scmp.eq.s32.totalorder %s23, 0
      %p92 = por %p90, %p91
      %s94 = sadd.s32 %s93, 1
      %p97 = scmp.eq.s32.totalorder %s17, 1
      %p98 = scmp.ne.s32.totalorder %s93, %s95
      %p99 = scmp.eq.s32.totalorder %s17, 0
      %p100 = por %p98, %p99
      %p101 = scmp.ne.s32.totalorder %s93, %s95
      %p102 = scmp.eq.s32.totalorder %s22, 1
      %p103 = por %p101, %p102
      %p104 = scmp.ne.s32.totalorder %s95, %s96
      %p105 = scmp.eq.s32.totalorder %s22, 0
      %p106 = por %p104, %p105
      %p107 = scmp.ne.s32.totalorder %s95, %s96
      %p108 = scmp.eq.s32.totalorder %s23, 1
      %p109 = por %p107, %p108
      %p111 = scmp.ne.s32.totalorder %s96, %s110
      %p112 = scmp.eq.s32.totalorder %s23, 0
      %p113 = por %p111, %p112
      %s114 = ssub.s32 %s17, %s24
      %p115 = scmp.eq.s32.totalorder %s114, 0
      %s117 = sadd.s32 %s116, 1
      %s118 = scalar_select %p115, %s116, %s117
      %p121 = pneg %p115
      %p122 = scmp.eq.s32.totalorder %s17, 1
      %p123 = por %p121, %p122
      %p124 = scmp.ne.s32.totalorder %s116, %s119
      %p125 = scmp.eq.s32.totalorder %s17, 0
      %p126 = por %p124, %p125
      %p127 = scmp.ne.s32.totalorder %s116, %s119
      %p128 = scmp.eq.s32.totalorder %s22, 1
      %p129 = por %p127, %p128
      %p130 = scmp.ne.s32.totalorder %s119, %s120
      %p131 = scmp.eq.s32.totalorder %s22, 0
      %p132 = por %p130, %p131
      %p133 = scmp.ne.s32.totalorder %s119, %s120
      %p134 = scmp.eq.s32.totalorder %s23, 1
      %p135 = por %p133, %p134
      %p137 = scmp.ne.s32.totalorder %s120, %s136
      %p138 = scmp.eq.s32.totalorder %s23, 0
      %p139 = por %p137, %p138
      %p140 = scmp.le.s32.totalorder 1, %s17
      %p141 = scmp.lt.s32.totalorder %s17, 3
      %p142 = pnand %p140, %p141
      %p143 = pneg %p142
      // Predicated region
      $region9: #{tpu_custom_call.1} parent=5 // pred_check
        _
      $region10: #{tpu_custom_call.1} parent=5 // pred_check_branch
        %145 = sbr.rel (%p142) target = $region12
      $region11: #{tpu_custom_call.1} parent=5 // pred_region
        %s146 = ssub.s32 %s17, 1
        // Predicated region
        $region13: #{tpu_custom_call.1} parent=11 // pred_check
          %p147 = pneg %p64
        $region14: #{tpu_custom_call.1} parent=11 // pred_check_branch
          %149 = sbr.rel (%p147) target = $region16
        $region15: #{tpu_custom_call.1} parent=11 // pred_region
          %s151 = ssub.s32 4608, 4608
          %152 = vsyncadd [#allocation6], %s151
          %s153 = sshll.u32 [#allocation5], 4
          %s154 = int_to_ptr.vmem [resolvable:$true] %s153
          %159 = dma.hbm_to_vmem [thread:$0]  %s1, 4608, %s154, [#allocation6], 128, 128, 8
        $region16: #{tpu_custom_call.1} parent=11 // pred_fallthru
          _
        // Predicated region
        $region17: #{tpu_custom_call.1} parent=11 // pred_check
          %p160 = pneg %p85
        $region18: #{tpu_custom_call.1} parent=11 // pred_check_branch
          %162 = sbr.rel (%p160) target = $region20
        $region19: #{tpu_custom_call.1} parent=11 // pred_region
          _
        $region20: #{tpu_custom_call.1} parent=11 // pred_fallthru
          _
        // Predicated region
        $region21: #{tpu_custom_call.1} parent=11 // pred_check
          %p163 = pneg %p106
        $region22: #{tpu_custom_call.1} parent=11 // pred_check_branch
          %165 = sbr.rel (%p163) target = $region24
        $region23: #{tpu_custom_call.1} parent=11 // pred_region
          _
        $region24: #{tpu_custom_call.1} parent=11 // pred_fallthru
          _
      $region12: #{tpu_custom_call.1} parent=5 // pred_fallthru
        _
      %p166 = scmp.lt.s32.totalorder %s17, 2
      // Predicated region
      $region25: #{tpu_custom_call.1} parent=5 // pred_check
        %p167 = pneg %p166
      $region26: #{tpu_custom_call.1} parent=5 // pred_check_branch
        %169 = sbr.rel (%p167) target = $region28
      $region27: #{tpu_custom_call.1} parent=5 // pred_region
        // Predicated region
        $region29: #{tpu_custom_call.1} parent=27 // pred_check
          %p170 = pneg %p37
        $region30: #{tpu_custom_call.1} parent=27 // pred_check_branch
          %172 = sbr.rel (%p170) target = $region32
        $region31: #{tpu_custom_call.1} parent=27 // pred_region
          %s173 = sand.u32 %s27, 1
          %s174 = scalar_lea.sflag [#allocation3], %s173
          %s175 = sand.u32 %s27, 1
          %s176 = smul.addr %s175, 96
          %s177 = scalar_lea.vmem [#allocation2], %s176
          %s179 = ssub.s32 1536, 1536
          %180 = vsyncadd %s174, %s179
          %s181 = smul.addr %s17, 12
          %s182 = smul.addr %s181, 128
          %s183 = scalar_lea.hbm %s0, %s182
          %s184 = sshll.u32 %s177, 4
          %s185 = int_to_ptr.vmem [resolvable:$true] %s184
          %190 = dma.hbm_to_vmem [thread:$0]  %s183, 1536, %s185, %s174, 384, 384, 24
        $region32: #{tpu_custom_call.1} parent=27 // pred_fallthru
          _
      $region28: #{tpu_custom_call.1} parent=5 // pred_fallthru
        _
      %p191 = scmp.le.s32.totalorder 1, %s17
      %p192 = scmp.lt.s32.totalorder %s17, 3
      %p193 = pnand %p191, %p192
      %p194 = pneg %p193
      // Predicated region
      $region33: #{tpu_custom_call.1} parent=5 // pred_check
        _
      $region34: #{tpu_custom_call.1} parent=5 // pred_check_branch
        %196 = sbr.rel (%p193) target = $region36
      $region35: #{tpu_custom_call.1} parent=5 // pred_region
        %s197 = ssub.s32 %s17, 1
        %s198 = sand.u32 %s30, 1
        %s199 = scalar_lea.sflag [#allocation3], %s198
        %s200 = sand.u32 %s30, 1
        %s201 = smul.addr %s200, 96
        %s202 = scalar_lea.vmem [#allocation2], %s201
        // Predicated region
        $region37: #{tpu_custom_call.1} parent=35 // pred_check
          %p203 = pneg %p43
        $region38: #{tpu_custom_call.1} parent=35 // pred_check_branch
          %205 = sbr.rel (%p203) target = $region40
        $region39: #{tpu_custom_call.1} parent=35 // pred_region
          %206 = dma.done %s199, 1536
        $region40: #{tpu_custom_call.1} parent=35 // pred_fallthru
          _
        // Predicated region
        $region41: #{tpu_custom_call.1} parent=35 // pred_check
          %p207 = pneg %p64
        $region42: #{tpu_custom_call.1} parent=35 // pred_check_branch
          %209 = sbr.rel (%p207) target = $region44
        $region43: #{tpu_custom_call.1} parent=35 // pred_region
          %210 = dma.done [#allocation6], 4608
        $region44: #{tpu_custom_call.1} parent=35 // pred_fallthru
          _
        %s211 = sand.u32 %s30, 1
        %s212 = scalar_lea.sflag [#allocation3], %s211
        %s213 = sand.u32 %s30, 1
        %s214 = smul.addr %s213, 96
        %s215 = scalar_lea.vmem [#allocation2], %s214
        %p216 = pneg %p43
        %p217 = pneg %p40
        %p218 = pneg %p64
        %p219 = pneg %p61
        %p220 = pneg %p85
        %p221 = pneg %p82
        %p222 = pneg %p106
        %p223 = pneg %p103
        %p224 = pneg %p132
        %p225 = pneg %p129
        %s226 = sand.u32 %s119, 1
        %s227 = scalar_lea.sflag [#allocation4], %s226
        %s228 = sand.u32 %s119, 1
        %s229 = smul.addr %s228, 24
        %s230 = scalar_lea.vmem [#allocation7], %s229
        %v231 = vld [vmem:[%s202] sm:$0xff]
        %v232 = vld [vmem:[%s202 + $0x8] sm:$0xff]
        %v233 = vld [vmem:[%s202 + $0x10] sm:$0xff]
        %v234 = vld [vmem:[%s202 + $0x18] sm:$0xff]
        %v235 = vld [vmem:[%s202 + $0x20] sm:$0xff]
        %v236 = vld [vmem:[%s202 + $0x28] sm:$0xff]
        %v237 = vld [vmem:[%s202 + $0x30] sm:$0xff]
        %v238 = vld [vmem:[%s202 + $0x38] sm:$0xff]
        %v239 = vld [vmem:[%s202 + $0x40] sm:$0xff]
        %v240 = vld [vmem:[%s202 + $0x48] sm:$0xff]
        %v241 = vld [vmem:[%s202 + $0x50] sm:$0xff]
        %v242 = vld [vmem:[%s202 + $0x58] sm:$0xff]
        %v243 = vld [vmem:[#allocation5] sm:$0xff]
        %v244 = vld [vmem:[#allocation5 + $0x8] sm:$0xff]
        %v245 = vld [vmem:[#allocation5 + $0x10] sm:$0xff]
        %v246 = vld [vmem:[#allocation5 + $0x18] sm:$0xff]
        %s247 = scalar_lea.vmem [#allocation5], 32
        %v248 = vld [vmem:[%s247] sm:$0xff]
        %v249 = vld [vmem:[%s247 + $0x8] sm:$0xff]
        %v250 = vld [vmem:[%s247 + $0x10] sm:$0xff]
        %v251 = vld [vmem:[%s247 + $0x18] sm:$0xff]
        %264 = vrot.lane.b32.xlu0 %v231, 127
        %v265 = vpop.permute.xlu0 %264
        %266 = vrot.lane.b32.xlu0 %v232, 127
        %v267 = vpop.permute.xlu0 %266
        %268 = vrot.lane.b32.xlu0 %v233, 127
        %v269 = vpop.permute.xlu0 %268
        %270 = vrot.lane.b32.xlu0 %v234, 127
        %v271 = vpop.permute.xlu0 %270
        %272 = vrot.lane.b32.xlu0 %v235, 127
        %v273 = vpop.permute.xlu0 %272
        %274 = vrot.lane.b32.xlu0 %v236, 127
        %v275 = vpop.permute.xlu0 %274
        %276 = vrot.lane.b32.xlu0 %v237, 127
        %v277 = vpop.permute.xlu0 %276
        %278 = vrot.lane.b32.xlu0 %v238, 127
        %v279 = vpop.permute.xlu0 %278
        %280 = vrot.lane.b32.xlu0 %v239, 127
        %v281 = vpop.permute.xlu0 %280
        %282 = vrot.lane.b32.xlu0 %v240, 127
        %v283 = vpop.permute.xlu0 %282
        %284 = vrot.lane.b32.xlu0 %v241, 127
        %v285 = vpop.permute.xlu0 %284
        %286 = vrot.lane.b32.xlu0 %v242, 127
        %v287 = vpop.permute.xlu0 %286
        %vm288 = vcmask 1039360
        %v289 = vsel %vm288, %v265, %v267
        %v290 = vsel %vm288, %v267, %v269
        %v291 = vsel %vm288, %v271, %v273
        %v292 = vsel %vm288, %v273, %v275
        %v293 = vsel %vm288, %v277, %v279
        %v294 = vsel %vm288, %v279, %v281
        %v295 = vsel %vm288, %v283, %v285
        %v296 = vsel %vm288, %v285, %v287
        %vm309 = vcmask 261120
        %v311 = vsel %vm309, %v248, 0
        %v314 = vsel %vm309, %v249, 0
        %v317 = vsel %vm309, %v250, 0
        %v320 = vsel %vm309, %v251, 0
        %322 = vmatprep.subr.mxu0 0.0
        %323 = vmatpush1.msra.mxu0 0.0
        %324 = vmatprep.subr.mxu0 0.0
        %325 = vmatpush1.msra.mxu0 0.0
        %326 = vmatprep.subr.mxu0 0.0
        %327 = vmatpush1.msra.mxu0 0.0
        %328 = vmatprep.subr.mxu0 0.0
        %329 = vmatpush1.msra.mxu0 0.0
        %330 = vmatprep.subr.mxu0 0.0
        %331 = vmatpush1.msra.mxu0 0.0
        %332 = vmatprep.subr.mxu0 0.0
        %333 = vmatpush1.msra.mxu0 0.0
        %334 = vmatprep.subr.mxu0 0.0
        %335 = vmatpush1.msra.mxu0 0.0
        %336 = vmatprep.subr.mxu0 0.0
        %337 = vmatpush1.msra.mxu0 0.0
        %338 = vmatprep.subr.mxu0 0.0
        %339 = vmatpush1.msra.mxu0 0.0
        %340 = vmatprep.subr.mxu0 0.0
        %341 = vmatpush1.msra.mxu0 0.0
        %342 = vmatprep.subr.mxu0 0.0
        %343 = vmatpush1.msra.mxu0 0.0
        %344 = vmatprep.subr.mxu0 0.0
        %345 = vmatpush1.msra.mxu0 0.0
        %346 = vmatprep.subr.mxu0 %v296
        %347 = vmatpush1.msra.mxu0 %v295
        %348 = vmatprep.subr.mxu0 %v294
        %349 = vmatpush1.msra.mxu0 %v293
        %350 = vmatprep.subr.mxu0 %v292
        %351 = vmatpush1.msra.mxu0 %v291
        %352 = vmatprep.subr.mxu0 %v290
        %353 = vmatpush1.msra.mxu0 %v289
        %354 = vmatprep.subr.mxu0 0.0
        %355 = vmatpush2.msra.mxu0 0.0
        %356 = vmatprep.subr.mxu0 0.0
        %357 = vmatpush2.msra.mxu0 0.0
        %358 = vmatprep.subr.mxu0 0.0
        %359 = vmatpush2.msra.mxu0 0.0
        %360 = vmatprep.subr.mxu0 0.0
        %361 = vmatpush2.msra.mxu0 0.0
        %362 = vmatprep.subr.mxu0 0.0
        %363 = vmatpush2.msra.mxu0 0.0
        %364 = vmatprep.subr.mxu0 0.0
        %365 = vmatpush2.msra.mxu0 0.0
        %366 = vmatprep.subr.mxu0 0.0
        %367 = vmatpush2.msra.mxu0 0.0
        %368 = vmatprep.subr.mxu0 0.0
        %369 = vmatpush2.msra.mxu0 0.0
        %370 = vmatprep.subr.mxu0 0.0
        %371 = vmatpush2.msra.mxu0 0.0
        %372 = vmatprep.subr.mxu0 0.0
        %373 = vmatpush2.msra.mxu0 0.0
        %374 = vmatprep.subr.mxu0 0.0
        %375 = vmatpush2.msra.mxu0 0.0
        %376 = vmatprep.subr.mxu0 0.0
        %377 = vmatpush2.msra.mxu0 0.0
        %378 = vmatprep.subr.mxu0 0.0
        %379 = vmatpush2.msra.mxu0 0.0
        %380 = vmatprep.subr.mxu0 0.0
        %381 = vmatpush2.msra.mxu0 0.0
        %382 = vmatprep.subr.mxu0 0.0
        %383 = vmatpush2.msra.mxu0 0.0
        %384 = vmatprep.subr.mxu0 0.0
        %385 = vmatpush2.msra.mxu0 0.0
        %386 = vmatprep.mubr.f32.mxu0 0.0
        %387 = vmatmul.mubr.f32.gmra.mxu0 %v311
        %v388 = vpop.f32.mrf.mxu0
        %v389 = vadd.f32 0.0, %v388
        %v390 = vpop.f32.mrf.mxu0
        %v391 = vadd.f32 0.0, %v390
        %392 = vmatprep.mubr.f32.mxu0 0.0
        %393 = vmatmul.mubr.f32.gmra.mxu0 %v314
        %v394 = vpop.f32.mrf.mxu0
        %v395 = vadd.f32 0.0, %v394
        %v396 = vpop.f32.mrf.mxu0
        %v397 = vadd.f32 0.0, %v396
        %398 = vmatprep.mubr.f32.mxu0 0.0
        %399 = vmatmul.mubr.f32.gmra.mxu0 %v317
        %v400 = vpop.f32.mrf.mxu0
        %v401 = vadd.f32 0.0, %v400
        %v402 = vpop.f32.mrf.mxu0
        %v403 = vadd.f32 0.0, %v402
        %404 = vmatprep.mubr.f32.mxu0 0.0
        %405 = vmatmul.mubr.f32.gmra.mxu0 %v320
        %v406 = vpop.f32.mrf.mxu0
        %v407 = vadd.f32 0.0, %v406
        %v408 = vpop.f32.mrf.mxu0
        %v409 = vadd.f32 0.0, %v408
        %410 = vdwg.mxu0
        %411 = vmatprep.subr.mxu0 0.0
        %412 = vmatpush1.msra.mxu0 0.0
        %413 = vmatprep.subr.mxu0 0.0
        %414 = vmatpush1.msra.mxu0 0.0
        %415 = vmatprep.subr.mxu0 0.0
        %416 = vmatpush1.msra.mxu0 0.0
        %417 = vmatprep.subr.mxu0 0.0
        %418 = vmatpush1.msra.mxu0 0.0
        %419 = vmatprep.subr.mxu0 0.0
        %420 = vmatpush1.msra.mxu0 0.0
        %421 = vmatprep.subr.mxu0 0.0
        %422 = vmatpush1.msra.mxu0 0.0
        %423 = vmatprep.subr.mxu0 0.0
        %424 = vmatpush1.msra.mxu0 0.0
        %425 = vmatprep.subr.mxu0 0.0
        %426 = vmatpush1.msra.mxu0 0.0
        %427 = vmatprep.subr.mxu0 0.0
        %428 = vmatpush1.msra.mxu0 0.0
        %429 = vmatprep.subr.mxu0 0.0
        %430 = vmatpush1.msra.mxu0 0.0
        %431 = vmatprep.subr.mxu0 0.0
        %432 = vmatpush1.msra.mxu0 0.0
        %433 = vmatprep.subr.mxu0 0.0
        %434 = vmatpush1.msra.mxu0 0.0
        %435 = vmatprep.subr.mxu0 0.0
        %436 = vmatpush1.msra.mxu0 %v287
        %437 = vmatprep.subr.mxu0 0.0
        %438 = vmatpush1.msra.mxu0 %v281
        %439 = vmatprep.subr.mxu0 0.0
        %440 = vmatpush1.msra.mxu0 %v275
        %441 = vmatprep.subr.mxu0 0.0
        %442 = vmatpush1.msra.mxu0 %v269
        %443 = vmatprep.subr.mxu0 0.0
        %444 = vmatpush2.msra.mxu0 0.0
        %445 = vmatprep.subr.mxu0 0.0
        %446 = vmatpush2.msra.mxu0 0.0
        %447 = vmatprep.subr.mxu0 0.0
        %448 = vmatpush2.msra.mxu0 0.0
        %449 = vmatprep.subr.mxu0 0.0
        %450 = vmatpush2.msra.mxu0 0.0
        %451 = vmatprep.subr.mxu0 0.0
        %452 = vmatpush2.msra.mxu0 0.0
        %453 = vmatprep.subr.mxu0 0.0
        %454 = vmatpush2.msra.mxu0 0.0
        %455 = vmatprep.subr.mxu0 0.0
        %456 = vmatpush2.msra.mxu0 0.0
        %457 = vmatprep.subr.mxu0 0.0
        %458 = vmatpush2.msra.mxu0 0.0
        %459 = vmatprep.subr.mxu0 0.0
        %460 = vmatpush2.msra.mxu0 0.0
        %461 = vmatprep.subr.mxu0 0.0
        %462 = vmatpush2.msra.mxu0 0.0
        %463 = vmatprep.subr.mxu0 0.0
        %464 = vmatpush2.msra.mxu0 0.0
        %465 = vmatprep.subr.mxu0 0.0
        %466 = vmatpush2.msra.mxu0 0.0
        %467 = vmatprep.subr.mxu0 0.0
        %468 = vmatpush2.msra.mxu0 0.0
        %469 = vmatprep.subr.mxu0 0.0
        %470 = vmatpush2.msra.mxu0 0.0
        %471 = vmatprep.subr.mxu0 0.0
        %472 = vmatpush2.msra.mxu0 0.0
        %473 = vmatprep.subr.mxu0 0.0
        %474 = vmatpush2.msra.mxu0 0.0
        %475 = vmatprep.mubr.f32.mxu0 0.0
        %476 = vmatmul.mubr.f32.gmra.mxu0 %v311
        %v477 = vpop.f32.mrf.mxu0
        %v478 = vadd.f32 0.0, %v477
        %v479 = vpop.f32.mrf.mxu0
        %480 = vmatprep.mubr.f32.mxu0 0.0
        %481 = vmatmul.mubr.f32.gmra.mxu0 %v314
        %v482 = vpop.f32.mrf.mxu0
        %v483 = vadd.f32 0.0, %v482
        %v484 = vpop.f32.mrf.mxu0
        %485 = vmatprep.mubr.f32.mxu0 0.0
        %486 = vmatmul.mubr.f32.gmra.mxu0 %v317
        %v487 = vpop.f32.mrf.mxu0
        %v488 = vadd.f32 0.0, %v487
        %v489 = vpop.f32.mrf.mxu0
        %490 = vmatprep.mubr.f32.mxu0 0.0
        %491 = vmatmul.mubr.f32.gmra.mxu0 %v320
        %v492 = vpop.f32.mrf.mxu0
        %v493 = vadd.f32 0.0, %v492
        %v494 = vpop.f32.mrf.mxu0
        %495 = vdwg.mxu0
        %v497 = vsel %vm309, %v243, 0
        %v500 = vsel %vm309, %v244, 0
        %v503 = vsel %vm309, %v245, 0
        %v506 = vsel %vm309, %v246, 0
        %508 = vmatprep.subr.mxu0 0.0
        %509 = vmatpush1.msra.mxu0 0.0
        %510 = vmatprep.subr.mxu0 0.0
        %511 = vmatpush1.msra.mxu0 0.0
        %512 = vmatprep.subr.mxu0 0.0
        %513 = vmatpush1.msra.mxu0 0.0
        %514 = vmatprep.subr.mxu0 0.0
        %515 = vmatpush1.msra.mxu0 0.0
        %516 = vmatprep.subr.mxu0 0.0
        %517 = vmatpush1.msra.mxu0 0.0
        %518 = vmatprep.subr.mxu0 0.0
        %519 = vmatpush1.msra.mxu0 0.0
        %520 = vmatprep.subr.mxu0 0.0
        %521 = vmatpush1.msra.mxu0 0.0
        %522 = vmatprep.subr.mxu0 0.0
        %523 = vmatpush1.msra.mxu0 0.0
        %524 = vmatprep.subr.mxu0 0.0
        %525 = vmatpush1.msra.mxu0 0.0
        %526 = vmatprep.subr.mxu0 0.0
        %527 = vmatpush1.msra.mxu0 0.0
        %528 = vmatprep.subr.mxu0 0.0
        %529 = vmatpush1.msra.mxu0 0.0
        %530 = vmatprep.subr.mxu0 0.0
        %531 = vmatpush1.msra.mxu0 0.0
        %532 = vmatprep.subr.mxu0 %v241
        %533 = vmatpush1.msra.mxu0 %v240
        %534 = vmatprep.subr.mxu0 %v238
        %535 = vmatpush1.msra.mxu0 %v237
        %536 = vmatprep.subr.mxu0 %v235
        %537 = vmatpush1.msra.mxu0 %v234
        %538 = vmatprep.subr.mxu0 %v232
        %539 = vmatpush1.msra.mxu0 %v231
        %540 = vmatprep.subr.mxu0 0.0
        %541 = vmatpush2.msra.mxu0 0.0
        %542 = vmatprep.subr.mxu0 0.0
        %543 = vmatpush2.msra.mxu0 0.0
        %544 = vmatprep.subr.mxu0 0.0
        %545 = vmatpush2.msra.mxu0 0.0
        %546 = vmatprep.subr.mxu0 0.0
        %547 = vmatpush2.msra.mxu0 0.0
        %548 = vmatprep.subr.mxu0 0.0
        %549 = vmatpush2.msra.mxu0 0.0
        %550 = vmatprep.subr.mxu0 0.0
        %551 = vmatpush2.msra.mxu0 0.0
        %552 = vmatprep.subr.mxu0 0.0
        %553 = vmatpush2.msra.mxu0 0.0
        %554 = vmatprep.subr.mxu0 0.0
        %555 = vmatpush2.msra.mxu0 0.0
        %556 = vmatprep.subr.mxu0 0.0
        %557 = vmatpush2.msra.mxu0 0.0
        %558 = vmatprep.subr.mxu0 0.0
        %559 = vmatpush2.msra.mxu0 0.0
        %560 = vmatprep.subr.mxu0 0.0
        %561 = vmatpush2.msra.mxu0 0.0
        %562 = vmatprep.subr.mxu0 0.0
        %563 = vmatpush2.msra.mxu0 0.0
        %564 = vmatprep.subr.mxu0 0.0
        %565 = vmatpush2.msra.mxu0 0.0
        %566 = vmatprep.subr.mxu0 0.0
        %567 = vmatpush2.msra.mxu0 0.0
        %568 = vmatprep.subr.mxu0 0.0
        %569 = vmatpush2.msra.mxu0 0.0
        %570 = vmatprep.subr.mxu0 0.0
        %571 = vmatpush2.msra.mxu0 0.0
        %572 = vmatprep.mubr.f32.mxu0 0.0
        %573 = vmatmul.mubr.f32.gmra.mxu0 %v497
        %v574 = vpop.f32.mrf.mxu0
        %v575 = vadd.f32 %v389, %v574
        %v576 = vpop.f32.mrf.mxu0
        %v577 = vadd.f32 %v391, %v576
        %578 = vmatprep.mubr.f32.mxu0 0.0
        %579 = vmatmul.mubr.f32.gmra.mxu0 %v500
        %v580 = vpop.f32.mrf.mxu0
        %v581 = vadd.f32 %v395, %v580
        %v582 = vpop.f32.mrf.mxu0
        %v583 = vadd.f32 %v397, %v582
        %584 = vmatprep.mubr.f32.mxu0 0.0
        %585 = vmatmul.mubr.f32.gmra.mxu0 %v503
        %v586 = vpop.f32.mrf.mxu0
        %v587 = vadd.f32 %v401, %v586
        %v588 = vpop.f32.mrf.mxu0
        %v589 = vadd.f32 %v403, %v588
        %590 = vmatprep.mubr.f32.mxu0 0.0
        %591 = vmatmul.mubr.f32.gmra.mxu0 %v506
        %v592 = vpop.f32.mrf.mxu0
        %v593 = vadd.f32 %v407, %v592
        %v594 = vpop.f32.mrf.mxu0
        %v595 = vadd.f32 %v409, %v594
        %596 = vdwg.mxu0
        %597 = vmatprep.subr.mxu0 0.0
        %598 = vmatpush1.msra.mxu0 0.0
        %599 = vmatprep.subr.mxu0 0.0
        %600 = vmatpush1.msra.mxu0 0.0
        %601 = vmatprep.subr.mxu0 0.0
        %602 = vmatpush1.msra.mxu0 0.0
        %603 = vmatprep.subr.mxu0 0.0
        %604 = vmatpush1.msra.mxu0 0.0
        %605 = vmatprep.subr.mxu0 0.0
        %606 = vmatpush1.msra.mxu0 0.0
        %607 = vmatprep.subr.mxu0 0.0
        %608 = vmatpush1.msra.mxu0 0.0
        %609 = vmatprep.subr.mxu0 0.0
        %610 = vmatpush1.msra.mxu0 0.0
        %611 = vmatprep.subr.mxu0 0.0
        %612 = vmatpush1.msra.mxu0 0.0
        %613 = vmatprep.subr.mxu0 0.0
        %614 = vmatpush1.msra.mxu0 0.0
        %615 = vmatprep.subr.mxu0 0.0
        %616 = vmatpush1.msra.mxu0 0.0
        %617 = vmatprep.subr.mxu0 0.0
        %618 = vmatpush1.msra.mxu0 0.0
        %619 = vmatprep.subr.mxu0 0.0
        %620 = vmatpush1.msra.mxu0 0.0
        %621 = vmatprep.subr.mxu0 0.0
        %622 = vmatpush1.msra.mxu0 %v242
        %623 = vmatprep.subr.mxu0 0.0
        %624 = vmatpush1.msra.mxu0 %v239
        %625 = vmatprep.subr.mxu0 0.0
        %626 = vmatpush1.msra.mxu0 %v236
        %627 = vmatprep.subr.mxu0 0.0
        %628 = vmatpush1.msra.mxu0 %v233
        %629 = vmatprep.subr.mxu0 0.0
        %630 = vmatpush2.msra.mxu0 0.0
        %631 = vmatprep.subr.mxu0 0.0
        %632 = vmatpush2.msra.mxu0 0.0
        %633 = vmatprep.subr.mxu0 0.0
        %634 = vmatpush2.msra.mxu0 0.0
        %635 = vmatprep.subr.mxu0 0.0
        %636 = vmatpush2.msra.mxu0 0.0
        %637 = vmatprep.subr.mxu0 0.0
        %638 = vmatpush2.msra.mxu0 0.0
        %639 = vmatprep.subr.mxu0 0.0
        %640 = vmatpush2.msra.mxu0 0.0
        %641 = vmatprep.subr.mxu0 0.0
        %642 = vmatpush2.msra.mxu0 0.0
        %643 = vmatprep.subr.mxu0 0.0
        %644 = vmatpush2.msra.mxu0 0.0
        %645 = vmatprep.subr.mxu0 0.0
        %646 = vmatpush2.msra.mxu0 0.0
        %647 = vmatprep.subr.mxu0 0.0
        %648 = vmatpush2.msra.mxu0 0.0
        %649 = vmatprep.subr.mxu0 0.0
        %650 = vmatpush2.msra.mxu0 0.0
        %651 = vmatprep.subr.mxu0 0.0
        %652 = vmatpush2.msra.mxu0 0.0
        %653 = vmatprep.subr.mxu0 0.0
        %654 = vmatpush2.msra.mxu0 0.0
        %655 = vmatprep.subr.mxu0 0.0
        %656 = vmatpush2.msra.mxu0 0.0
        %657 = vmatprep.subr.mxu0 0.0
        %658 = vmatpush2.msra.mxu0 0.0
        %659 = vmatprep.subr.mxu0 0.0
        %660 = vmatpush2.msra.mxu0 0.0
        %661 = vmatprep.mubr.f32.mxu0 0.0
        %662 = vmatmul.mubr.f32.gmra.mxu0 %v497
        %v663 = vpop.f32.mrf.mxu0
        %v664 = vadd.f32 %v478, %v663
        %v665 = vpop.f32.mrf.mxu0
        %666 = vmatprep.mubr.f32.mxu0 0.0
        %667 = vmatmul.mubr.f32.gmra.mxu0 %v500
        %v668 = vpop.f32.mrf.mxu0
        %v669 = vadd.f32 %v483, %v668
        %v670 = vpop.f32.mrf.mxu0
        %671 = vmatprep.mubr.f32.mxu0 0.0
        %672 = vmatmul.mubr.f32.gmra.mxu0 %v503
        %v673 = vpop.f32.mrf.mxu0
        %v674 = vadd.f32 %v488, %v673
        %v675 = vpop.f32.mrf.mxu0
        %676 = vmatprep.mubr.f32.mxu0 0.0
        %677 = vmatmul.mubr.f32.gmra.mxu0 %v506
        %v678 = vpop.f32.mrf.mxu0
        %v679 = vadd.f32 %v493, %v678
        %v680 = vpop.f32.mrf.mxu0
        %681 = vdwg.mxu0
        %s682 = scalar_lea.vmem [#allocation5], 64
        %v683 = vld [vmem:[%s682] sm:$0xff]
        %v684 = vld [vmem:[%s682 + $0x8] sm:$0xff]
        %v685 = vld [vmem:[%s682 + $0x10] sm:$0xff]
        %v686 = vld [vmem:[%s682 + $0x18] sm:$0xff]
        %687 = vrot.lane.b32.xlu0 %v231, 126
        %v688 = vpop.permute.xlu0 %687
        %689 = vrot.lane.b32.xlu0 %v232, 126
        %v690 = vpop.permute.xlu0 %689
        %691 = vrot.lane.b32.xlu0 %v233, 126
        %v692 = vpop.permute.xlu0 %691
        %693 = vrot.lane.b32.xlu0 %v234, 126
        %v694 = vpop.permute.xlu0 %693
        %695 = vrot.lane.b32.xlu0 %v235, 126
        %v696 = vpop.permute.xlu0 %695
        %697 = vrot.lane.b32.xlu0 %v236, 126
        %v698 = vpop.permute.xlu0 %697
        %699 = vrot.lane.b32.xlu0 %v237, 126
        %v700 = vpop.permute.xlu0 %699
        %701 = vrot.lane.b32.xlu0 %v238, 126
        %v702 = vpop.permute.xlu0 %701
        %703 = vrot.lane.b32.xlu0 %v239, 126
        %v704 = vpop.permute.xlu0 %703
        %705 = vrot.lane.b32.xlu0 %v240, 126
        %v706 = vpop.permute.xlu0 %705
        %707 = vrot.lane.b32.xlu0 %v241, 126
        %v708 = vpop.permute.xlu0 %707
        %709 = vrot.lane.b32.xlu0 %v242, 126
        %v710 = vpop.permute.xlu0 %709
        %vm711 = vcmask 1031168
        %v712 = vsel %vm711, %v688, %v690
        %v713 = vsel %vm711, %v690, %v692
        %v714 = vsel %vm711, %v694, %v696
        %v715 = vsel %vm711, %v696, %v698
        %v716 = vsel %vm711, %v700, %v702
        %v717 = vsel %vm711, %v702, %v704
        %v718 = vsel %vm711, %v706, %v708
        %v719 = vsel %vm711, %v708, %v710
        %v733 = vsel %vm309, %v683, 0
        %v736 = vsel %vm309, %v684, 0
        %v739 = vsel %vm309, %v685, 0
        %v742 = vsel %vm309, %v686, 0
        %744 = vmatprep.subr.mxu0 0.0
        %745 = vmatpush1.msra.mxu0 0.0
        %746 = vmatprep.subr.mxu0 0.0
        %747 = vmatpush1.msra.mxu0 0.0
        %748 = vmatprep.subr.mxu0 0.0
        %749 = vmatpush1.msra.mxu0 0.0
        %750 = vmatprep.subr.mxu0 0.0
        %751 = vmatpush1.msra.mxu0 0.0
        %752 = vmatprep.subr.mxu0 0.0
        %753 = vmatpush1.msra.mxu0 0.0
        %754 = vmatprep.subr.mxu0 0.0
        %755 = vmatpush1.msra.mxu0 0.0
        %756 = vmatprep.subr.mxu0 0.0
        %757 = vmatpush1.msra.mxu0 0.0
        %758 = vmatprep.subr.mxu0 0.0
        %759 = vmatpush1.msra.mxu0 0.0
        %760 = vmatprep.subr.mxu0 0.0
        %761 = vmatpush1.msra.mxu0 0.0
        %762 = vmatprep.subr.mxu0 0.0
        %763 = vmatpush1.msra.mxu0 0.0
        %764 = vmatprep.subr.mxu0 0.0
        %765 = vmatpush1.msra.mxu0 0.0
        %766 = vmatprep.subr.mxu0 0.0
        %767 = vmatpush1.msra.mxu0 0.0
        %768 = vmatprep.subr.mxu0 %v719
        %769 = vmatpush1.msra.mxu0 %v718
        %770 = vmatprep.subr.mxu0 %v717
        %771 = vmatpush1.msra.mxu0 %v716
        %772 = vmatprep.subr.mxu0 %v715
        %773 = vmatpush1.msra.mxu0 %v714
        %774 = vmatprep.subr.mxu0 %v713
        %775 = vmatpush1.msra.mxu0 %v712
        %776 = vmatprep.subr.mxu0 0.0
        %777 = vmatpush2.msra.mxu0 0.0
        %778 = vmatprep.subr.mxu0 0.0
        %779 = vmatpush2.msra.mxu0 0.0
        %780 = vmatprep.subr.mxu0 0.0
        %781 = vmatpush2.msra.mxu0 0.0
        %782 = vmatprep.subr.mxu0 0.0
        %783 = vmatpush2.msra.mxu0 0.0
        %784 = vmatprep.subr.mxu0 0.0
        %785 = vmatpush2.msra.mxu0 0.0
        %786 = vmatprep.subr.mxu0 0.0
        %787 = vmatpush2.msra.mxu0 0.0
        %788 = vmatprep.subr.mxu0 0.0
        %789 = vmatpush2.msra.mxu0 0.0
        %790 = vmatprep.subr.mxu0 0.0
        %791 = vmatpush2.msra.mxu0 0.0
        %792 = vmatprep.subr.mxu0 0.0
        %793 = vmatpush2.msra.mxu0 0.0
        %794 = vmatprep.subr.mxu0 0.0
        %795 = vmatpush2.msra.mxu0 0.0
        %796 = vmatprep.subr.mxu0 0.0
        %797 = vmatpush2.msra.mxu0 0.0
        %798 = vmatprep.subr.mxu0 0.0
        %799 = vmatpush2.msra.mxu0 0.0
        %800 = vmatprep.subr.mxu0 0.0
        %801 = vmatpush2.msra.mxu0 0.0
        %802 = vmatprep.subr.mxu0 0.0
        %803 = vmatpush2.msra.mxu0 0.0
        %804 = vmatprep.subr.mxu0 0.0
        %805 = vmatpush2.msra.mxu0 0.0
        %806 = vmatprep.subr.mxu0 0.0
        %807 = vmatpush2.msra.mxu0 0.0
        %808 = vmatprep.mubr.f32.mxu0 0.0
        %809 = vmatmul.mubr.f32.gmra.mxu0 %v733
        %v810 = vpop.f32.mrf.mxu0
        %v811 = vadd.f32 0.0, %v810
        %v812 = vpop.f32.mrf.mxu0
        %v813 = vadd.f32 0.0, %v812
        %814 = vmatprep.mubr.f32.mxu0 0.0
        %815 = vmatmul.mubr.f32.gmra.mxu0 %v736
        %v816 = vpop.f32.mrf.mxu0
        %v817 = vadd.f32 0.0, %v816
        %v818 = vpop.f32.mrf.mxu0
        %v819 = vadd.f32 0.0, %v818
        %820 = vmatprep.mubr.f32.mxu0 0.0
        %821 = vmatmul.mubr.f32.gmra.mxu0 %v739
        %v822 = vpop.f32.mrf.mxu0
        %v823 = vadd.f32 0.0, %v822
        %v824 = vpop.f32.mrf.mxu0
        %v825 = vadd.f32 0.0, %v824
        %826 = vmatprep.mubr.f32.mxu0 0.0
        %827 = vmatmul.mubr.f32.gmra.mxu0 %v742
        %v828 = vpop.f32.mrf.mxu0
        %v829 = vadd.f32 0.0, %v828
        %v830 = vpop.f32.mrf.mxu0
        %v831 = vadd.f32 0.0, %v830
        %832 = vdwg.mxu0
        %833 = vmatprep.subr.mxu0 0.0
        %834 = vmatpush1.msra.mxu0 0.0
        %835 = vmatprep.subr.mxu0 0.0
        %836 = vmatpush1.msra.mxu0 0.0
        %837 = vmatprep.subr.mxu0 0.0
        %838 = vmatpush1.msra.mxu0 0.0
        %839 = vmatprep.subr.mxu0 0.0
        %840 = vmatpush1.msra.mxu0 0.0
        %841 = vmatprep.subr.mxu0 0.0
        %842 = vmatpush1.msra.mxu0 0.0
        %843 = vmatprep.subr.mxu0 0.0
        %844 = vmatpush1.msra.mxu0 0.0
        %845 = vmatprep.subr.mxu0 0.0
        %846 = vmatpush1.msra.mxu0 0.0
        %847 = vmatprep.subr.mxu0 0.0
        %848 = vmatpush1.msra.mxu0 0.0
        %849 = vmatprep.subr.mxu0 0.0
        %850 = vmatpush1.msra.mxu0 0.0
        %851 = vmatprep.subr.mxu0 0.0
        %852 = vmatpush1.msra.mxu0 0.0
        %853 = vmatprep.subr.mxu0 0.0
        %854 = vmatpush1.msra.mxu0 0.0
        %855 = vmatprep.subr.mxu0 0.0
        %856 = vmatpush1.msra.mxu0 0.0
        %857 = vmatprep.subr.mxu0 0.0
        %858 = vmatpush1.msra.mxu0 %v710
        %859 = vmatprep.subr.mxu0 0.0
        %860 = vmatpush1.msra.mxu0 %v704
        %861 = vmatprep.subr.mxu0 0.0
        %862 = vmatpush1.msra.mxu0 %v698
        %863 = vmatprep.subr.mxu0 0.0
        %864 = vmatpush1.msra.mxu0 %v692
        %865 = vmatprep.subr.mxu0 0.0
        %866 = vmatpush2.msra.mxu0 0.0
        %867 = vmatprep.subr.mxu0 0.0
        %868 = vmatpush2.msra.mxu0 0.0
        %869 = vmatprep.subr.mxu0 0.0
        %870 = vmatpush2.msra.mxu0 0.0
        %871 = vmatprep.subr.mxu0 0.0
        %872 = vmatpush2.msra.mxu0 0.0
        %873 = vmatprep.subr.mxu0 0.0
        %874 = vmatpush2.msra.mxu0 0.0
        %875 = vmatprep.subr.mxu0 0.0
        %876 = vmatpush2.msra.mxu0 0.0
        %877 = vmatprep.subr.mxu0 0.0
        %878 = vmatpush2.msra.mxu0 0.0
        %879 = vmatprep.subr.mxu0 0.0
        %880 = vmatpush2.msra.mxu0 0.0
        %881 = vmatprep.subr.mxu0 0.0
        %882 = vmatpush2.msra.mxu0 0.0
        %883 = vmatprep.subr.mxu0 0.0
        %884 = vmatpush2.msra.mxu0 0.0
        %885 = vmatprep.subr.mxu0 0.0
        %886 = vmatpush2.msra.mxu0 0.0
        %887 = vmatprep.subr.mxu0 0.0
        %888 = vmatpush2.msra.mxu0 0.0
        %889 = vmatprep.subr.mxu0 0.0
        %890 = vmatpush2.msra.mxu0 0.0
        %891 = vmatprep.subr.mxu0 0.0
        %892 = vmatpush2.msra.mxu0 0.0
        %893 = vmatprep.subr.mxu0 0.0
        %894 = vmatpush2.msra.mxu0 0.0
        %895 = vmatprep.subr.mxu0 0.0
        %896 = vmatpush2.msra.mxu0 0.0
        %897 = vmatprep.mubr.f32.mxu0 0.0
        %898 = vmatmul.mubr.f32.gmra.mxu0 %v733
        %v899 = vpop.f32.mrf.mxu0
        %v900 = vadd.f32 0.0, %v899
        %v901 = vpop.f32.mrf.mxu0
        %902 = vmatprep.mubr.f32.mxu0 0.0
        %903 = vmatmul.mubr.f32.gmra.mxu0 %v736
        %v904 = vpop.f32.mrf.mxu0
        %v905 = vadd.f32 0.0, %v904
        %v906 = vpop.f32.mrf.mxu0
        %907 = vmatprep.mubr.f32.mxu0 0.0
        %908 = vmatmul.mubr.f32.gmra.mxu0 %v739
        %v909 = vpop.f32.mrf.mxu0
        %v910 = vadd.f32 0.0, %v909
        %v911 = vpop.f32.mrf.mxu0
        %912 = vmatprep.mubr.f32.mxu0 0.0
        %913 = vmatmul.mubr.f32.gmra.mxu0 %v742
        %v914 = vpop.f32.mrf.mxu0
        %v915 = vadd.f32 0.0, %v914
        %v916 = vpop.f32.mrf.mxu0
        %917 = vdwg.mxu0
        %v918 = vadd.f32 %v575, %v811
        %v919 = vadd.f32 %v577, %v813
        %v920 = vadd.f32 %v664, %v900
        %v921 = vadd.f32 %v581, %v817
        %v922 = vadd.f32 %v583, %v819
        %v923 = vadd.f32 %v669, %v905
        %v924 = vadd.f32 %v587, %v823
        %v925 = vadd.f32 %v589, %v825
        %v926 = vadd.f32 %v674, %v910
        %v927 = vadd.f32 %v593, %v829
        %v928 = vadd.f32 %v595, %v831
        %v929 = vadd.f32 %v679, %v915
        %s930 = scalar_lea.vmem [#allocation5], 96
        %v931 = vld [vmem:[%s930] sm:$0xff]
        %v932 = vld [vmem:[%s930 + $0x8] sm:$0xff]
        %v933 = vld [vmem:[%s930 + $0x10] sm:$0xff]
        %v934 = vld [vmem:[%s930 + $0x18] sm:$0xff]
        %935 = vrot.lane.b32.xlu0 %v231, 110
        %v936 = vpop.permute.xlu0 %935
        %937 = vrot.lane.b32.xlu0 %v232, 110
        %v938 = vpop.permute.xlu0 %937
        %939 = vrot.lane.b32.xlu0 %v233, 110
        %v940 = vpop.permute.xlu0 %939
        %941 = vrot.lane.b32.xlu0 %v234, 110
        %v942 = vpop.permute.xlu0 %941
        %943 = vrot.lane.b32.xlu0 %v235, 110
        %v944 = vpop.permute.xlu0 %943
        %945 = vrot.lane.b32.xlu0 %v236, 110
        %v946 = vpop.permute.xlu0 %945
        %947 = vrot.lane.b32.xlu0 %v237, 110
        %v948 = vpop.permute.xlu0 %947
        %949 = vrot.lane.b32.xlu0 %v238, 110
        %v950 = vpop.permute.xlu0 %949
        %951 = vrot.lane.b32.xlu0 %v239, 110
        %v952 = vpop.permute.xlu0 %951
        %953 = vrot.lane.b32.xlu0 %v240, 110
        %v954 = vpop.permute.xlu0 %953
        %955 = vrot.lane.b32.xlu0 %v241, 110
        %v956 = vpop.permute.xlu0 %955
        %957 = vrot.lane.b32.xlu0 %v242, 110
        %v958 = vpop.permute.xlu0 %957
        %vm959 = vcmask 900096
        %v960 = vsel %vm959, %v936, %v938
        %v961 = vsel %vm959, %v938, %v940
        %v962 = vsel %vm959, %v942, %v944
        %v963 = vsel %vm959, %v944, %v946
        %v964 = vsel %vm959, %v948, %v950
        %v965 = vsel %vm959, %v950, %v952
        %v966 = vsel %vm959, %v954, %v956
        %v967 = vsel %vm959, %v956, %v958
        %v981 = vsel %vm309, %v931, 0
        %v984 = vsel %vm309, %v932, 0
        %v987 = vsel %vm309, %v933, 0
        %v990 = vsel %vm309, %v934, 0
        %992 = vmatprep.subr.mxu0 0.0
        %993 = vmatpush1.msra.mxu0 0.0
        %994 = vmatprep.subr.mxu0 0.0
        %995 = vmatpush1.msra.mxu0 0.0
        %996 = vmatprep.subr.mxu0 0.0
        %997 = vmatpush1.msra.mxu0 0.0
        %998 = vmatprep.subr.mxu0 0.0
        %999 = vmatpush1.msra.mxu0 0.0
        %1000 = vmatprep.subr.mxu0 0.0
        %1001 = vmatpush1.msra.mxu0 0.0
        %1002 = vmatprep.subr.mxu0 0.0
        %1003 = vmatpush1.msra.mxu0 0.0
        %1004 = vmatprep.subr.mxu0 0.0
        %1005 = vmatpush1.msra.mxu0 0.0
        %1006 = vmatprep.subr.mxu0 0.0
        %1007 = vmatpush1.msra.mxu0 0.0
        %1008 = vmatprep.subr.mxu0 0.0
        %1009 = vmatpush1.msra.mxu0 0.0
        %1010 = vmatprep.subr.mxu0 0.0
        %1011 = vmatpush1.msra.mxu0 0.0
        %1012 = vmatprep.subr.mxu0 0.0
        %1013 = vmatpush1.msra.mxu0 0.0
        %1014 = vmatprep.subr.mxu0 0.0
        %1015 = vmatpush1.msra.mxu0 0.0
        %1016 = vmatprep.subr.mxu0 %v967
        %1017 = vmatpush1.msra.mxu0 %v966
        %1018 = vmatprep.subr.mxu0 %v965
        %1019 = vmatpush1.msra.mxu0 %v964
        %1020 = vmatprep.subr.mxu0 %v963
        %1021 = vmatpush1.msra.mxu0 %v962
        %1022 = vmatprep.subr.mxu0 %v961
        %1023 = vmatpush1.msra.mxu0 %v960
        %1024 = vmatprep.subr.mxu0 0.0
        %1025 = vmatpush2.msra.mxu0 0.0
        %1026 = vmatprep.subr.mxu0 0.0
        %1027 = vmatpush2.msra.mxu0 0.0
        %1028 = vmatprep.subr.mxu0 0.0
        %1029 = vmatpush2.msra.mxu0 0.0
        %1030 = vmatprep.subr.mxu0 0.0
        %1031 = vmatpush2.msra.mxu0 0.0
        %1032 = vmatprep.subr.mxu0 0.0
        %1033 = vmatpush2.msra.mxu0 0.0
        %1034 = vmatprep.subr.mxu0 0.0
        %1035 = vmatpush2.msra.mxu0 0.0
        %1036 = vmatprep.subr.mxu0 0.0
        %1037 = vmatpush2.msra.mxu0 0.0
        %1038 = vmatprep.subr.mxu0 0.0
        %1039 = vmatpush2.msra.mxu0 0.0
        %1040 = vmatprep.subr.mxu0 0.0
        %1041 = vmatpush2.msra.mxu0 0.0
        %1042 = vmatprep.subr.mxu0 0.0
        %1043 = vmatpush2.msra.mxu0 0.0
        %1044 = vmatprep.subr.mxu0 0.0
        %1045 = vmatpush2.msra.mxu0 0.0
        %1046 = vmatprep.subr.mxu0 0.0
        %1047 = vmatpush2.msra.mxu0 0.0
        %1048 = vmatprep.subr.mxu0 0.0
        %1049 = vmatpush2.msra.mxu0 0.0
        %1050 = vmatprep.subr.mxu0 0.0
        %1051 = vmatpush2.msra.mxu0 0.0
        %1052 = vmatprep.subr.mxu0 0.0
        %1053 = vmatpush2.msra.mxu0 0.0
        %1054 = vmatprep.subr.mxu0 0.0
        %1055 = vmatpush2.msra.mxu0 0.0
        %1056 = vmatprep.mubr.f32.mxu0 0.0
        %1057 = vmatmul.mubr.f32.gmra.mxu0 %v981
        %v1058 = vpop.f32.mrf.mxu0
        %v1059 = vadd.f32 0.0, %v1058
        %v1060 = vpop.f32.mrf.mxu0
        %v1061 = vadd.f32 0.0, %v1060
        %1062 = vmatprep.mubr.f32.mxu0 0.0
        %1063 = vmatmul.mubr.f32.gmra.mxu0 %v984
        %v1064 = vpop.f32.mrf.mxu0
        %v1065 = vadd.f32 0.0, %v1064
        %v1066 = vpop.f32.mrf.mxu0
        %v1067 = vadd.f32 0.0, %v1066
        %1068 = vmatprep.mubr.f32.mxu0 0.0
        %1069 = vmatmul.mubr.f32.gmra.mxu0 %v987
        %v1070 = vpop.f32.mrf.mxu0
        %v1071 = vadd.f32 0.0, %v1070
        %v1072 = vpop.f32.mrf.mxu0
        %v1073 = vadd.f32 0.0, %v1072
        %1074 = vmatprep.mubr.f32.mxu0 0.0
        %1075 = vmatmul.mubr.f32.gmra.mxu0 %v990
        %v1076 = vpop.f32.mrf.mxu0
        %v1077 = vadd.f32 0.0, %v1076
        %v1078 = vpop.f32.mrf.mxu0
        %v1079 = vadd.f32 0.0, %v1078
        %1080 = vdwg.mxu0
        %1081 = vmatprep.subr.mxu0 0.0
        %1082 = vmatpush1.msra.mxu0 0.0
        %1083 = vmatprep.subr.mxu0 0.0
        %1084 = vmatpush1.msra.mxu0 0.0
        %1085 = vmatprep.subr.mxu0 0.0
        %1086 = vmatpush1.msra.mxu0 0.0
        %1087 = vmatprep.subr.mxu0 0.0
        %1088 = vmatpush1.msra.mxu0 0.0
        %1089 = vmatprep.subr.mxu0 0.0
        %1090 = vmatpush1.msra.mxu0 0.0
        %1091 = vmatprep.subr.mxu0 0.0
        %1092 = vmatpush1.msra.mxu0 0.0
        %1093 = vmatprep.subr.mxu0 0.0
        %1094 = vmatpush1.msra.mxu0 0.0
        %1095 = vmatprep.subr.mxu0 0.0
        %1096 = vmatpush1.msra.mxu0 0.0
        %1097 = vmatprep.subr.mxu0 0.0
        %1098 = vmatpush1.msra.mxu0 0.0
        %1099 = vmatprep.subr.mxu0 0.0
        %1100 = vmatpush1.msra.mxu0 0.0
        %1101 = vmatprep.subr.mxu0 0.0
        %1102 = vmatpush1.msra.mxu0 0.0
        %1103 = vmatprep.subr.mxu0 0.0
        %1104 = vmatpush1.msra.mxu0 0.0
        %1105 = vmatprep.subr.mxu0 0.0
        %1106 = vmatpush1.msra.mxu0 %v958
        %1107 = vmatprep.subr.mxu0 0.0
        %1108 = vmatpush1.msra.mxu0 %v952
        %1109 = vmatprep.subr.mxu0 0.0
        %1110 = vmatpush1.msra.mxu0 %v946
        %1111 = vmatprep.subr.mxu0 0.0
        %1112 = vmatpush1.msra.mxu0 %v940
        %1113 = vmatprep.subr.mxu0 0.0
        %1114 = vmatpush2.msra.mxu0 0.0
        %1115 = vmatprep.subr.mxu0 0.0
        %1116 = vmatpush2.msra.mxu0 0.0
        %1117 = vmatprep.subr.mxu0 0.0
        %1118 = vmatpush2.msra.mxu0 0.0
        %1119 = vmatprep.subr.mxu0 0.0
        %1120 = vmatpush2.msra.mxu0 0.0
        %1121 = vmatprep.subr.mxu0 0.0
        %1122 = vmatpush2.msra.mxu0 0.0
        %1123 = vmatprep.subr.mxu0 0.0
        %1124 = vmatpush2.msra.mxu0 0.0
        %1125 = vmatprep.subr.mxu0 0.0
        %1126 = vmatpush2.msra.mxu0 0.0
        %1127 = vmatprep.subr.mxu0 0.0
        %1128 = vmatpush2.msra.mxu0 0.0
        %1129 = vmatprep.subr.mxu0 0.0
        %1130 = vmatpush2.msra.mxu0 0.0
        %1131 = vmatprep.subr.mxu0 0.0
        %1132 = vmatpush2.msra.mxu0 0.0
        %1133 = vmatprep.subr.mxu0 0.0
        %1134 = vmatpush2.msra.mxu0 0.0
        %1135 = vmatprep.subr.mxu0 0.0
        %1136 = vmatpush2.msra.mxu0 0.0
        %1137 = vmatprep.subr.mxu0 0.0
        %1138 = vmatpush2.msra.mxu0 0.0
        %1139 = vmatprep.subr.mxu0 0.0
        %1140 = vmatpush2.msra.mxu0 0.0
        %1141 = vmatprep.subr.mxu0 0.0
        %1142 = vmatpush2.msra.mxu0 0.0
        %1143 = vmatprep.subr.mxu0 0.0
        %1144 = vmatpush2.msra.mxu0 0.0
        %1145 = vmatprep.mubr.f32.mxu0 0.0
        %1146 = vmatmul.mubr.f32.gmra.mxu0 %v981
        %v1147 = vpop.f32.mrf.mxu0
        %v1148 = vadd.f32 0.0, %v1147
        %v1149 = vpop.f32.mrf.mxu0
        %1150 = vmatprep.mubr.f32.mxu0 0.0
        %1151 = vmatmul.mubr.f32.gmra.mxu0 %v984
        %v1152 = vpop.f32.mrf.mxu0
        %v1153 = vadd.f32 0.0, %v1152
        %v1154 = vpop.f32.mrf.mxu0
        %1155 = vmatprep.mubr.f32.mxu0 0.0
        %1156 = vmatmul.mubr.f32.gmra.mxu0 %v987
        %v1157 = vpop.f32.mrf.mxu0
        %v1158 = vadd.f32 0.0, %v1157
        %v1159 = vpop.f32.mrf.mxu0
        %1160 = vmatprep.mubr.f32.mxu0 0.0
        %1161 = vmatmul.mubr.f32.gmra.mxu0 %v990
        %v1162 = vpop.f32.mrf.mxu0
        %v1163 = vadd.f32 0.0, %v1162
        %v1164 = vpop.f32.mrf.mxu0
        %1165 = vdwg.mxu0
        %v1166 = vadd.f32 %v918, %v1059
        %v1167 = vadd.f32 %v919, %v1061
        %v1168 = vadd.f32 %v920, %v1148
        %v1169 = vadd.f32 %v921, %v1065
        %v1170 = vadd.f32 %v922, %v1067
        %v1171 = vadd.f32 %v923, %v1153
        %v1172 = vadd.f32 %v924, %v1071
        %v1173 = vadd.f32 %v925, %v1073
        %v1174 = vadd.f32 %v926, %v1158
        %v1175 = vadd.f32 %v927, %v1077
        %v1176 = vadd.f32 %v928, %v1079
        %v1177 = vadd.f32 %v929, %v1163
        %s1178 = scalar_lea.vmem [#allocation5], 128
        %v1179 = vld [vmem:[%s1178] sm:$0xff]
        %v1180 = vld [vmem:[%s1178 + $0x8] sm:$0xff]
        %v1181 = vld [vmem:[%s1178 + $0x10] sm:$0xff]
        %v1182 = vld [vmem:[%s1178 + $0x18] sm:$0xff]
        %1183 = vrot.lane.b32.xlu0 %v231, 109
        %v1184 = vpop.permute.xlu0 %1183
        %1185 = vrot.lane.b32.xlu0 %v232, 109
        %v1186 = vpop.permute.xlu0 %1185
        %1187 = vrot.lane.b32.xlu0 %v233, 109
        %v1188 = vpop.permute.xlu0 %1187
        %1189 = vrot.lane.b32.xlu0 %v234, 109
        %v1190 = vpop.permute.xlu0 %1189
        %1191 = vrot.lane.b32.xlu0 %v235, 109
        %v1192 = vpop.permute.xlu0 %1191
        %1193 = vrot.lane.b32.xlu0 %v236, 109
        %v1194 = vpop.permute.xlu0 %1193
        %1195 = vrot.lane.b32.xlu0 %v237, 109
        %v1196 = vpop.permute.xlu0 %1195
        %1197 = vrot.lane.b32.xlu0 %v238, 109
        %v1198 = vpop.permute.xlu0 %1197
        %1199 = vrot.lane.b32.xlu0 %v239, 109
        %v1200 = vpop.permute.xlu0 %1199
        %1201 = vrot.lane.b32.xlu0 %v240, 109
        %v1202 = vpop.permute.xlu0 %1201
        %1203 = vrot.lane.b32.xlu0 %v241, 109
        %v1204 = vpop.permute.xlu0 %1203
        %1205 = vrot.lane.b32.xlu0 %v242, 109
        %v1206 = vpop.permute.xlu0 %1205
        %vm1207 = vcmask 891904
        %v1208 = vsel %vm1207, %v1184, %v1186
        %v1209 = vsel %vm1207, %v1186, %v1188
        %v1210 = vsel %vm1207, %v1190, %v1192
        %v1211 = vsel %vm1207, %v1192, %v1194
        %v1212 = vsel %vm1207, %v1196, %v1198
        %v1213 = vsel %vm1207, %v1198, %v1200
        %v1214 = vsel %vm1207, %v1202, %v1204
        %v1215 = vsel %vm1207, %v1204, %v1206
        %v1229 = vsel %vm309, %v1179, 0
        %v1232 = vsel %vm309, %v1180, 0
        %v1235 = vsel %vm309, %v1181, 0
        %v1238 = vsel %vm309, %v1182, 0
        %1240 = vmatprep.subr.mxu0 0.0
        %1241 = vmatpush1.msra.mxu0 0.0
        %1242 = vmatprep.subr.mxu0 0.0
        %1243 = vmatpush1.msra.mxu0 0.0
        %1244 = vmatprep.subr.mxu0 0.0
        %1245 = vmatpush1.msra.mxu0 0.0
        %1246 = vmatprep.subr.mxu0 0.0
        %1247 = vmatpush1.msra.mxu0 0.0
        %1248 = vmatprep.subr.mxu0 0.0
        %1249 = vmatpush1.msra.mxu0 0.0
        %1250 = vmatprep.subr.mxu0 0.0
        %1251 = vmatpush1.msra.mxu0 0.0
        %1252 = vmatprep.subr.mxu0 0.0
        %1253 = vmatpush1.msra.mxu0 0.0
        %1254 = vmatprep.subr.mxu0 0.0
        %1255 = vmatpush1.msra.mxu0 0.0
        %1256 = vmatprep.subr.mxu0 0.0
        %1257 = vmatpush1.msra.mxu0 0.0
        %1258 = vmatprep.subr.mxu0 0.0
        %1259 = vmatpush1.msra.mxu0 0.0
        %1260 = vmatprep.subr.mxu0 0.0
        %1261 = vmatpush1.msra.mxu0 0.0
        %1262 = vmatprep.subr.mxu0 0.0
        %1263 = vmatpush1.msra.mxu0 0.0
        %1264 = vmatprep.subr.mxu0 %v1215
        %1265 = vmatpush1.msra.mxu0 %v1214
        %1266 = vmatprep.subr.mxu0 %v1213
        %1267 = vmatpush1.msra.mxu0 %v1212
        %1268 = vmatprep.subr.mxu0 %v1211
        %1269 = vmatpush1.msra.mxu0 %v1210
        %1270 = vmatprep.subr.mxu0 %v1209
        %1271 = vmatpush1.msra.mxu0 %v1208
        %1272 = vmatprep.subr.mxu0 0.0
        %1273 = vmatpush2.msra.mxu0 0.0
        %1274 = vmatprep.subr.mxu0 0.0
        %1275 = vmatpush2.msra.mxu0 0.0
        %1276 = vmatprep.subr.mxu0 0.0
        %1277 = vmatpush2.msra.mxu0 0.0
        %1278 = vmatprep.subr.mxu0 0.0
        %1279 = vmatpush2.msra.mxu0 0.0
        %1280 = vmatprep.subr.mxu0 0.0
        %1281 = vmatpush2.msra.mxu0 0.0
        %1282 = vmatprep.subr.mxu0 0.0
        %1283 = vmatpush2.msra.mxu0 0.0
        %1284 = vmatprep.subr.mxu0 0.0
        %1285 = vmatpush2.msra.mxu0 0.0
        %1286 = vmatprep.subr.mxu0 0.0
        %1287 = vmatpush2.msra.mxu0 0.0
        %1288 = vmatprep.subr.mxu0 0.0
        %1289 = vmatpush2.msra.mxu0 0.0
        %1290 = vmatprep.subr.mxu0 0.0
        %1291 = vmatpush2.msra.mxu0 0.0
        %1292 = vmatprep.subr.mxu0 0.0
        %1293 = vmatpush2.msra.mxu0 0.0
        %1294 = vmatprep.subr.mxu0 0.0
        %1295 = vmatpush2.msra.mxu0 0.0
        %1296 = vmatprep.subr.mxu0 0.0
        %1297 = vmatpush2.msra.mxu0 0.0
        %1298 = vmatprep.subr.mxu0 0.0
        %1299 = vmatpush2.msra.mxu0 0.0
        %1300 = vmatprep.subr.mxu0 0.0
        %1301 = vmatpush2.msra.mxu0 0.0
        %1302 = vmatprep.subr.mxu0 0.0
        %1303 = vmatpush2.msra.mxu0 0.0
        %1304 = vmatprep.mubr.f32.mxu0 0.0
        %1305 = vmatmul.mubr.f32.gmra.mxu0 %v1229
        %v1306 = vpop.f32.mrf.mxu0
        %v1307 = vadd.f32 0.0, %v1306
        %v1308 = vpop.f32.mrf.mxu0
        %v1309 = vadd.f32 0.0, %v1308
        %1310 = vmatprep.mubr.f32.mxu0 0.0
        %1311 = vmatmul.mubr.f32.gmra.mxu0 %v1232
        %v1312 = vpop.f32.mrf.mxu0
        %v1313 = vadd.f32 0.0, %v1312
        %v1314 = vpop.f32.mrf.mxu0
        %v1315 = vadd.f32 0.0, %v1314
        %1316 = vmatprep.mubr.f32.mxu0 0.0
        %1317 = vmatmul.mubr.f32.gmra.mxu0 %v1235
        %v1318 = vpop.f32.mrf.mxu0
        %v1319 = vadd.f32 0.0, %v1318
        %v1320 = vpop.f32.mrf.mxu0
        %v1321 = vadd.f32 0.0, %v1320
        %1322 = vmatprep.mubr.f32.mxu0 0.0
        %1323 = vmatmul.mubr.f32.gmra.mxu0 %v1238
        %v1324 = vpop.f32.mrf.mxu0
        %v1325 = vadd.f32 0.0, %v1324
        %v1326 = vpop.f32.mrf.mxu0
        %v1327 = vadd.f32 0.0, %v1326
        %1328 = vdwg.mxu0
        %1329 = vmatprep.subr.mxu0 0.0
        %1330 = vmatpush1.msra.mxu0 0.0
        %1331 = vmatprep.subr.mxu0 0.0
        %1332 = vmatpush1.msra.mxu0 0.0
        %1333 = vmatprep.subr.mxu0 0.0
        %1334 = vmatpush1.msra.mxu0 0.0
        %1335 = vmatprep.subr.mxu0 0.0
        %1336 = vmatpush1.msra.mxu0 0.0
        %1337 = vmatprep.subr.mxu0 0.0
        %1338 = vmatpush1.msra.mxu0 0.0
        %1339 = vmatprep.subr.mxu0 0.0
        %1340 = vmatpush1.msra.mxu0 0.0
        %1341 = vmatprep.subr.mxu0 0.0
        %1342 = vmatpush1.msra.mxu0 0.0
        %1343 = vmatprep.subr.mxu0 0.0
        %1344 = vmatpush1.msra.mxu0 0.0
        %1345 = vmatprep.subr.mxu0 0.0
        %1346 = vmatpush1.msra.mxu0 0.0
        %1347 = vmatprep.subr.mxu0 0.0
        %1348 = vmatpush1.msra.mxu0 0.0
        %1349 = vmatprep.subr.mxu0 0.0
        %1350 = vmatpush1.msra.mxu0 0.0
        %1351 = vmatprep.subr.mxu0 0.0
        %1352 = vmatpush1.msra.mxu0 0.0
        %1353 = vmatprep.subr.mxu0 0.0
        %1354 = vmatpush1.msra.mxu0 %v1206
        %1355 = vmatprep.subr.mxu0 0.0
        %1356 = vmatpush1.msra.mxu0 %v1200
        %1357 = vmatprep.subr.mxu0 0.0
        %1358 = vmatpush1.msra.mxu0 %v1194
        %1359 = vmatprep.subr.mxu0 0.0
        %1360 = vmatpush1.msra.mxu0 %v1188
        %1361 = vmatprep.subr.mxu0 0.0
        %1362 = vmatpush2.msra.mxu0 0.0
        %1363 = vmatprep.subr.mxu0 0.0
        %1364 = vmatpush2.msra.mxu0 0.0
        %1365 = vmatprep.subr.mxu0 0.0
        %1366 = vmatpush2.msra.mxu0 0.0
        %1367 = vmatprep.subr.mxu0 0.0
        %1368 = vmatpush2.msra.mxu0 0.0
        %1369 = vmatprep.subr.mxu0 0.0
        %1370 = vmatpush2.msra.mxu0 0.0
        %1371 = vmatprep.subr.mxu0 0.0
        %1372 = vmatpush2.msra.mxu0 0.0
        %1373 = vmatprep.subr.mxu0 0.0
        %1374 = vmatpush2.msra.mxu0 0.0
        %1375 = vmatprep.subr.mxu0 0.0
        %1376 = vmatpush2.msra.mxu0 0.0
        %1377 = vmatprep.subr.mxu0 0.0
        %1378 = vmatpush2.msra.mxu0 0.0
        %1379 = vmatprep.subr.mxu0 0.0
        %1380 = vmatpush2.msra.mxu0 0.0
        %1381 = vmatprep.subr.mxu0 0.0
        %1382 = vmatpush2.msra.mxu0 0.0
        %1383 = vmatprep.subr.mxu0 0.0
        %1384 = vmatpush2.msra.mxu0 0.0
        %1385 = vmatprep.subr.mxu0 0.0
        %1386 = vmatpush2.msra.mxu0 0.0
        %1387 = vmatprep.subr.mxu0 0.0
        %1388 = vmatpush2.msra.mxu0 0.0
        %1389 = vmatprep.subr.mxu0 0.0
        %1390 = vmatpush2.msra.mxu0 0.0
        %1391 = vmatprep.subr.mxu0 0.0
        %1392 = vmatpush2.msra.mxu0 0.0
        %1393 = vmatprep.mubr.f32.mxu0 0.0
        %1394 = vmatmul.mubr.f32.gmra.mxu0 %v1229
        %v1395 = vpop.f32.mrf.mxu0
        %v1396 = vadd.f32 0.0, %v1395
        %v1397 = vpop.f32.mrf.mxu0
        %1398 = vmatprep.mubr.f32.mxu0 0.0
        %1399 = vmatmul.mubr.f32.gmra.mxu0 %v1232
        %v1400 = vpop.f32.mrf.mxu0
        %v1401 = vadd.f32 0.0, %v1400
        %v1402 = vpop.f32.mrf.mxu0
        %1403 = vmatprep.mubr.f32.mxu0 0.0
        %1404 = vmatmul.mubr.f32.gmra.mxu0 %v1235
        %v1405 = vpop.f32.mrf.mxu0
        %v1406 = vadd.f32 0.0, %v1405
        %v1407 = vpop.f32.mrf.mxu0
        %1408 = vmatprep.mubr.f32.mxu0 0.0
        %1409 = vmatmul.mubr.f32.gmra.mxu0 %v1238
        %v1410 = vpop.f32.mrf.mxu0
        %v1411 = vadd.f32 0.0, %v1410
        %v1412 = vpop.f32.mrf.mxu0
        %1413 = vdwg.mxu0
        %v1414 = vadd.f32 %v1166, %v1307
        %v1415 = vadd.f32 %v1167, %v1309
        %v1416 = vadd.f32 %v1168, %v1396
        %v1417 = vadd.f32 %v1169, %v1313
        %v1418 = vadd.f32 %v1170, %v1315
        %v1419 = vadd.f32 %v1171, %v1401
        %v1420 = vadd.f32 %v1172, %v1319
        %v1421 = vadd.f32 %v1173, %v1321
        %v1422 = vadd.f32 %v1174, %v1406
        %v1423 = vadd.f32 %v1175, %v1325
        %v1424 = vadd.f32 %v1176, %v1327
        %v1425 = vadd.f32 %v1177, %v1411
        %s1426 = scalar_lea.vmem [#allocation5], 160
        %v1427 = vld [vmem:[%s1426] sm:$0xff]
        %v1428 = vld [vmem:[%s1426 + $0x8] sm:$0xff]
        %v1429 = vld [vmem:[%s1426 + $0x10] sm:$0xff]
        %v1430 = vld [vmem:[%s1426 + $0x18] sm:$0xff]
        %1431 = vrot.lane.b32.xlu0 %v231, 108
        %v1432 = vpop.permute.xlu0 %1431
        %1433 = vrot.lane.b32.xlu0 %v232, 108
        %v1434 = vpop.permute.xlu0 %1433
        %1435 = vrot.lane.b32.xlu0 %v233, 108
        %v1436 = vpop.permute.xlu0 %1435
        %1437 = vrot.lane.b32.xlu0 %v234, 108
        %v1438 = vpop.permute.xlu0 %1437
        %1439 = vrot.lane.b32.xlu0 %v235, 108
        %v1440 = vpop.permute.xlu0 %1439
        %1441 = vrot.lane.b32.xlu0 %v236, 108
        %v1442 = vpop.permute.xlu0 %1441
        %1443 = vrot.lane.b32.xlu0 %v237, 108
        %v1444 = vpop.permute.xlu0 %1443
        %1445 = vrot.lane.b32.xlu0 %v238, 108
        %v1446 = vpop.permute.xlu0 %1445
        %1447 = vrot.lane.b32.xlu0 %v239, 108
        %v1448 = vpop.permute.xlu0 %1447
        %1449 = vrot.lane.b32.xlu0 %v240, 108
        %v1450 = vpop.permute.xlu0 %1449
        %1451 = vrot.lane.b32.xlu0 %v241, 108
        %v1452 = vpop.permute.xlu0 %1451
        %1453 = vrot.lane.b32.xlu0 %v242, 108
        %v1454 = vpop.permute.xlu0 %1453
        %vm1455 = vcmask 883712
        %v1456 = vsel %vm1455, %v1432, %v1434
        %v1457 = vsel %vm1455, %v1434, %v1436
        %v1458 = vsel %vm1455, %v1438, %v1440
        %v1459 = vsel %vm1455, %v1440, %v1442
        %v1460 = vsel %vm1455, %v1444, %v1446
        %v1461 = vsel %vm1455, %v1446, %v1448
        %v1462 = vsel %vm1455, %v1450, %v1452
        %v1463 = vsel %vm1455, %v1452, %v1454
        %v1477 = vsel %vm309, %v1427, 0
        %v1480 = vsel %vm309, %v1428, 0
        %v1483 = vsel %vm309, %v1429, 0
        %v1486 = vsel %vm309, %v1430, 0
        %1488 = vmatprep.subr.mxu0 0.0
        %1489 = vmatpush1.msra.mxu0 0.0
        %1490 = vmatprep.subr.mxu0 0.0
        %1491 = vmatpush1.msra.mxu0 0.0
        %1492 = vmatprep.subr.mxu0 0.0
        %1493 = vmatpush1.msra.mxu0 0.0
        %1494 = vmatprep.subr.mxu0 0.0
        %1495 = vmatpush1.msra.mxu0 0.0
        %1496 = vmatprep.subr.mxu0 0.0
        %1497 = vmatpush1.msra.mxu0 0.0
        %1498 = vmatprep.subr.mxu0 0.0
        %1499 = vmatpush1.msra.mxu0 0.0
        %1500 = vmatprep.subr.mxu0 0.0
        %1501 = vmatpush1.msra.mxu0 0.0
        %1502 = vmatprep.subr.mxu0 0.0
        %1503 = vmatpush1.msra.mxu0 0.0
        %1504 = vmatprep.subr.mxu0 0.0
        %1505 = vmatpush1.msra.mxu0 0.0
        %1506 = vmatprep.subr.mxu0 0.0
        %1507 = vmatpush1.msra.mxu0 0.0
        %1508 = vmatprep.subr.mxu0 0.0
        %1509 = vmatpush1.msra.mxu0 0.0
        %1510 = vmatprep.subr.mxu0 0.0
        %1511 = vmatpush1.msra.mxu0 0.0
        %1512 = vmatprep.subr.mxu0 %v1463
        %1513 = vmatpush1.msra.mxu0 %v1462
        %1514 = vmatprep.subr.mxu0 %v1461
        %1515 = vmatpush1.msra.mxu0 %v1460
        %1516 = vmatprep.subr.mxu0 %v1459
        %1517 = vmatpush1.msra.mxu0 %v1458
        %1518 = vmatprep.subr.mxu0 %v1457
        %1519 = vmatpush1.msra.mxu0 %v1456
        %1520 = vmatprep.subr.mxu0 0.0
        %1521 = vmatpush2.msra.mxu0 0.0
        %1522 = vmatprep.subr.mxu0 0.0
        %1523 = vmatpush2.msra.mxu0 0.0
        %1524 = vmatprep.subr.mxu0 0.0
        %1525 = vmatpush2.msra.mxu0 0.0
        %1526 = vmatprep.subr.mxu0 0.0
        %1527 = vmatpush2.msra.mxu0 0.0
        %1528 = vmatprep.subr.mxu0 0.0
        %1529 = vmatpush2.msra.mxu0 0.0
        %1530 = vmatprep.subr.mxu0 0.0
        %1531 = vmatpush2.msra.mxu0 0.0
        %1532 = vmatprep.subr.mxu0 0.0
        %1533 = vmatpush2.msra.mxu0 0.0
        %1534 = vmatprep.subr.mxu0 0.0
        %1535 = vmatpush2.msra.mxu0 0.0
        %1536 = vmatprep.subr.mxu0 0.0
        %1537 = vmatpush2.msra.mxu0 0.0
        %1538 = vmatprep.subr.mxu0 0.0
        %1539 = vmatpush2.msra.mxu0 0.0
        %1540 = vmatprep.subr.mxu0 0.0
        %1541 = vmatpush2.msra.mxu0 0.0
        %1542 = vmatprep.subr.mxu0 0.0
        %1543 = vmatpush2.msra.mxu0 0.0
        %1544 = vmatprep.subr.mxu0 0.0
        %1545 = vmatpush2.msra.mxu0 0.0
        %1546 = vmatprep.subr.mxu0 0.0
        %1547 = vmatpush2.msra.mxu0 0.0
        %1548 = vmatprep.subr.mxu0 0.0
        %1549 = vmatpush2.msra.mxu0 0.0
        %1550 = vmatprep.subr.mxu0 0.0
        %1551 = vmatpush2.msra.mxu0 0.0
        %1552 = vmatprep.mubr.f32.mxu0 0.0
        %1553 = vmatmul.mubr.f32.gmra.mxu0 %v1477
        %v1554 = vpop.f32.mrf.mxu0
        %v1555 = vadd.f32 0.0, %v1554
        %v1556 = vpop.f32.mrf.mxu0
        %v1557 = vadd.f32 0.0, %v1556
        %1558 = vmatprep.mubr.f32.mxu0 0.0
        %1559 = vmatmul.mubr.f32.gmra.mxu0 %v1480
        %v1560 = vpop.f32.mrf.mxu0
        %v1561 = vadd.f32 0.0, %v1560
        %v1562 = vpop.f32.mrf.mxu0
        %v1563 = vadd.f32 0.0, %v1562
        %1564 = vmatprep.mubr.f32.mxu0 0.0
        %1565 = vmatmul.mubr.f32.gmra.mxu0 %v1483
        %v1566 = vpop.f32.mrf.mxu0
        %v1567 = vadd.f32 0.0, %v1566
        %v1568 = vpop.f32.mrf.mxu0
        %v1569 = vadd.f32 0.0, %v1568
        %1570 = vmatprep.mubr.f32.mxu0 0.0
        %1571 = vmatmul.mubr.f32.gmra.mxu0 %v1486
        %v1572 = vpop.f32.mrf.mxu0
        %v1573 = vadd.f32 0.0, %v1572
        %v1574 = vpop.f32.mrf.mxu0
        %v1575 = vadd.f32 0.0, %v1574
        %1576 = vdwg.mxu0
        %1577 = vmatprep.subr.mxu0 0.0
        %1578 = vmatpush1.msra.mxu0 0.0
        %1579 = vmatprep.subr.mxu0 0.0
        %1580 = vmatpush1.msra.mxu0 0.0
        %1581 = vmatprep.subr.mxu0 0.0
        %1582 = vmatpush1.msra.mxu0 0.0
        %1583 = vmatprep.subr.mxu0 0.0
        %1584 = vmatpush1.msra.mxu0 0.0
        %1585 = vmatprep.subr.mxu0 0.0
        %1586 = vmatpush1.msra.mxu0 0.0
        %1587 = vmatprep.subr.mxu0 0.0
        %1588 = vmatpush1.msra.mxu0 0.0
        %1589 = vmatprep.subr.mxu0 0.0
        %1590 = vmatpush1.msra.mxu0 0.0
        %1591 = vmatprep.subr.mxu0 0.0
        %1592 = vmatpush1.msra.mxu0 0.0
        %1593 = vmatprep.subr.mxu0 0.0
        %1594 = vmatpush1.msra.mxu0 0.0
        %1595 = vmatprep.subr.mxu0 0.0
        %1596 = vmatpush1.msra.mxu0 0.0
        %1597 = vmatprep.subr.mxu0 0.0
        %1598 = vmatpush1.msra.mxu0 0.0
        %1599 = vmatprep.subr.mxu0 0.0
        %1600 = vmatpush1.msra.mxu0 0.0
        %1601 = vmatprep.subr.mxu0 0.0
        %1602 = vmatpush1.msra.mxu0 %v1454
        %1603 = vmatprep.subr.mxu0 0.0
        %1604 = vmatpush1.msra.mxu0 %v1448
        %1605 = vmatprep.subr.mxu0 0.0
        %1606 = vmatpush1.msra.mxu0 %v1442
        %1607 = vmatprep.subr.mxu0 0.0
        %1608 = vmatpush1.msra.mxu0 %v1436
        %1609 = vmatprep.subr.mxu0 0.0
        %1610 = vmatpush2.msra.mxu0 0.0
        %1611 = vmatprep.subr.mxu0 0.0
        %1612 = vmatpush2.msra.mxu0 0.0
        %1613 = vmatprep.subr.mxu0 0.0
        %1614 = vmatpush2.msra.mxu0 0.0
        %1615 = vmatprep.subr.mxu0 0.0
        %1616 = vmatpush2.msra.mxu0 0.0
        %1617 = vmatprep.subr.mxu0 0.0
        %1618 = vmatpush2.msra.mxu0 0.0
        %1619 = vmatprep.subr.mxu0 0.0
        %1620 = vmatpush2.msra.mxu0 0.0
        %1621 = vmatprep.subr.mxu0 0.0
        %1622 = vmatpush2.msra.mxu0 0.0
        %1623 = vmatprep.subr.mxu0 0.0
        %1624 = vmatpush2.msra.mxu0 0.0
        %1625 = vmatprep.subr.mxu0 0.0
        %1626 = vmatpush2.msra.mxu0 0.0
        %1627 = vmatprep.subr.mxu0 0.0
        %1628 = vmatpush2.msra.mxu0 0.0
        %1629 = vmatprep.subr.mxu0 0.0
        %1630 = vmatpush2.msra.mxu0 0.0
        %1631 = vmatprep.subr.mxu0 0.0
        %1632 = vmatpush2.msra.mxu0 0.0
        %1633 = vmatprep.subr.mxu0 0.0
        %1634 = vmatpush2.msra.mxu0 0.0
        %1635 = vmatprep.subr.mxu0 0.0
        %1636 = vmatpush2.msra.mxu0 0.0
        %1637 = vmatprep.subr.mxu0 0.0
        %1638 = vmatpush2.msra.mxu0 0.0
        %1639 = vmatprep.subr.mxu0 0.0
        %1640 = vmatpush2.msra.mxu0 0.0
        %1641 = vmatprep.mubr.f32.mxu0 0.0
        %1642 = vmatmul.mubr.f32.gmra.mxu0 %v1477
        %v1643 = vpop.f32.mrf.mxu0
        %v1644 = vadd.f32 0.0, %v1643
        %v1645 = vpop.f32.mrf.mxu0
        %1646 = vmatprep.mubr.f32.mxu0 0.0
        %1647 = vmatmul.mubr.f32.gmra.mxu0 %v1480
        %v1648 = vpop.f32.mrf.mxu0
        %v1649 = vadd.f32 0.0, %v1648
        %v1650 = vpop.f32.mrf.mxu0
        %1651 = vmatprep.mubr.f32.mxu0 0.0
        %1652 = vmatmul.mubr.f32.gmra.mxu0 %v1483
        %v1653 = vpop.f32.mrf.mxu0
        %v1654 = vadd.f32 0.0, %v1653
        %v1655 = vpop.f32.mrf.mxu0
        %1656 = vmatprep.mubr.f32.mxu0 0.0
        %1657 = vmatmul.mubr.f32.gmra.mxu0 %v1486
        %v1658 = vpop.f32.mrf.mxu0
        %v1659 = vadd.f32 0.0, %v1658
        %v1660 = vpop.f32.mrf.mxu0
        %1661 = vdwg.mxu0
        %v1662 = vadd.f32 %v1414, %v1555
        %v1663 = vadd.f32 %v1415, %v1557
        %v1664 = vadd.f32 %v1416, %v1644
        %v1665 = vadd.f32 %v1417, %v1561
        %v1666 = vadd.f32 %v1418, %v1563
        %v1667 = vadd.f32 %v1419, %v1649
        %v1668 = vadd.f32 %v1420, %v1567
        %v1669 = vadd.f32 %v1421, %v1569
        %v1670 = vadd.f32 %v1422, %v1654
        %v1671 = vadd.f32 %v1423, %v1573
        %v1672 = vadd.f32 %v1424, %v1575
        %v1673 = vadd.f32 %v1425, %v1659
        %s1674 = scalar_lea.vmem [#allocation5], 192
        %v1675 = vld [vmem:[%s1674] sm:$0xff]
        %v1676 = vld [vmem:[%s1674 + $0x8] sm:$0xff]
        %v1677 = vld [vmem:[%s1674 + $0x10] sm:$0xff]
        %v1678 = vld [vmem:[%s1674 + $0x18] sm:$0xff]
        %1679 = vrot.lane.b32.xlu0 %v231, 92
        %v1680 = vpop.permute.xlu0 %1679
        %1681 = vrot.lane.b32.xlu0 %v232, 92
        %v1682 = vpop.permute.xlu0 %1681
        %1683 = vrot.lane.b32.xlu0 %v233, 92
        %v1684 = vpop.permute.xlu0 %1683
        %1685 = vrot.lane.b32.xlu0 %v234, 92
        %v1686 = vpop.permute.xlu0 %1685
        %1687 = vrot.lane.b32.xlu0 %v235, 92
        %v1688 = vpop.permute.xlu0 %1687
        %1689 = vrot.lane.b32.xlu0 %v236, 92
        %v1690 = vpop.permute.xlu0 %1689
        %1691 = vrot.lane.b32.xlu0 %v237, 92
        %v1692 = vpop.permute.xlu0 %1691
        %1693 = vrot.lane.b32.xlu0 %v238, 92
        %v1694 = vpop.permute.xlu0 %1693
        %1695 = vrot.lane.b32.xlu0 %v239, 92
        %v1696 = vpop.permute.xlu0 %1695
        %1697 = vrot.lane.b32.xlu0 %v240, 92
        %v1698 = vpop.permute.xlu0 %1697
        %1699 = vrot.lane.b32.xlu0 %v241, 92
        %v1700 = vpop.permute.xlu0 %1699
        %1701 = vrot.lane.b32.xlu0 %v242, 92
        %v1702 = vpop.permute.xlu0 %1701
        %vm1703 = vcmask 752640
        %v1704 = vsel %vm1703, %v1680, %v1682
        %v1705 = vsel %vm1703, %v1682, %v1684
        %v1706 = vsel %vm1703, %v1686, %v1688
        %v1707 = vsel %vm1703, %v1688, %v1690
        %v1708 = vsel %vm1703, %v1692, %v1694
        %v1709 = vsel %vm1703, %v1694, %v1696
        %v1710 = vsel %vm1703, %v1698, %v1700
        %v1711 = vsel %vm1703, %v1700, %v1702
        %v1725 = vsel %vm309, %v1675, 0
        %v1728 = vsel %vm309, %v1676, 0
        %v1731 = vsel %vm309, %v1677, 0
        %v1734 = vsel %vm309, %v1678, 0
        %1736 = vmatprep.subr.mxu0 0.0
        %1737 = vmatpush1.msra.mxu0 0.0
        %1738 = vmatprep.subr.mxu0 0.0
        %1739 = vmatpush1.msra.mxu0 0.0
        %1740 = vmatprep.subr.mxu0 0.0
        %1741 = vmatpush1.msra.mxu0 0.0
        %1742 = vmatprep.subr.mxu0 0.0
        %1743 = vmatpush1.msra.mxu0 0.0
        %1744 = vmatprep.subr.mxu0 0.0
        %1745 = vmatpush1.msra.mxu0 0.0
        %1746 = vmatprep.subr.mxu0 0.0
        %1747 = vmatpush1.msra.mxu0 0.0
        %1748 = vmatprep.subr.mxu0 0.0
        %1749 = vmatpush1.msra.mxu0 0.0
        %1750 = vmatprep.subr.mxu0 0.0
        %1751 = vmatpush1.msra.mxu0 0.0
        %1752 = vmatprep.subr.mxu0 0.0
        %1753 = vmatpush1.msra.mxu0 0.0
        %1754 = vmatprep.subr.mxu0 0.0
        %1755 = vmatpush1.msra.mxu0 0.0
        %1756 = vmatprep.subr.mxu0 0.0
        %1757 = vmatpush1.msra.mxu0 0.0
        %1758 = vmatprep.subr.mxu0 0.0
        %1759 = vmatpush1.msra.mxu0 0.0
        %1760 = vmatprep.subr.mxu0 %v1711
        %1761 = vmatpush1.msra.mxu0 %v1710
        %1762 = vmatprep.subr.mxu0 %v1709
        %1763 = vmatpush1.msra.mxu0 %v1708
        %1764 = vmatprep.subr.mxu0 %v1707
        %1765 = vmatpush1.msra.mxu0 %v1706
        %1766 = vmatprep.subr.mxu0 %v1705
        %1767 = vmatpush1.msra.mxu0 %v1704
        %1768 = vmatprep.subr.mxu0 0.0
        %1769 = vmatpush2.msra.mxu0 0.0
        %1770 = vmatprep.subr.mxu0 0.0
        %1771 = vmatpush2.msra.mxu0 0.0
        %1772 = vmatprep.subr.mxu0 0.0
        %1773 = vmatpush2.msra.mxu0 0.0
        %1774 = vmatprep.subr.mxu0 0.0
        %1775 = vmatpush2.msra.mxu0 0.0
        %1776 = vmatprep.subr.mxu0 0.0
        %1777 = vmatpush2.msra.mxu0 0.0
        %1778 = vmatprep.subr.mxu0 0.0
        %1779 = vmatpush2.msra.mxu0 0.0
        %1780 = vmatprep.subr.mxu0 0.0
        %1781 = vmatpush2.msra.mxu0 0.0
        %1782 = vmatprep.subr.mxu0 0.0
        %1783 = vmatpush2.msra.mxu0 0.0
        %1784 = vmatprep.subr.mxu0 0.0
        %1785 = vmatpush2.msra.mxu0 0.0
        %1786 = vmatprep.subr.mxu0 0.0
        %1787 = vmatpush2.msra.mxu0 0.0
        %1788 = vmatprep.subr.mxu0 0.0
        %1789 = vmatpush2.msra.mxu0 0.0
        %1790 = vmatprep.subr.mxu0 0.0
        %1791 = vmatpush2.msra.mxu0 0.0
        %1792 = vmatprep.subr.mxu0 0.0
        %1793 = vmatpush2.msra.mxu0 0.0
        %1794 = vmatprep.subr.mxu0 0.0
        %1795 = vmatpush2.msra.mxu0 0.0
        %1796 = vmatprep.subr.mxu0 0.0
        %1797 = vmatpush2.msra.mxu0 0.0
        %1798 = vmatprep.subr.mxu0 0.0
        %1799 = vmatpush2.msra.mxu0 0.0
        %1800 = vmatprep.mubr.f32.mxu0 0.0
        %1801 = vmatmul.mubr.f32.gmra.mxu0 %v1725
        %v1802 = vpop.f32.mrf.mxu0
        %v1803 = vadd.f32 0.0, %v1802
        %v1804 = vpop.f32.mrf.mxu0
        %v1805 = vadd.f32 0.0, %v1804
        %1806 = vmatprep.mubr.f32.mxu0 0.0
        %1807 = vmatmul.mubr.f32.gmra.mxu0 %v1728
        %v1808 = vpop.f32.mrf.mxu0
        %v1809 = vadd.f32 0.0, %v1808
        %v1810 = vpop.f32.mrf.mxu0
        %v1811 = vadd.f32 0.0, %v1810
        %1812 = vmatprep.mubr.f32.mxu0 0.0
        %1813 = vmatmul.mubr.f32.gmra.mxu0 %v1731
        %v1814 = vpop.f32.mrf.mxu0
        %v1815 = vadd.f32 0.0, %v1814
        %v1816 = vpop.f32.mrf.mxu0
        %v1817 = vadd.f32 0.0, %v1816
        %1818 = vmatprep.mubr.f32.mxu0 0.0
        %1819 = vmatmul.mubr.f32.gmra.mxu0 %v1734
        %v1820 = vpop.f32.mrf.mxu0
        %v1821 = vadd.f32 0.0, %v1820
        %v1822 = vpop.f32.mrf.mxu0
        %v1823 = vadd.f32 0.0, %v1822
        %1824 = vdwg.mxu0
        %1825 = vmatprep.subr.mxu0 0.0
        %1826 = vmatpush1.msra.mxu0 0.0
        %1827 = vmatprep.subr.mxu0 0.0
        %1828 = vmatpush1.msra.mxu0 0.0
        %1829 = vmatprep.subr.mxu0 0.0
        %1830 = vmatpush1.msra.mxu0 0.0
        %1831 = vmatprep.subr.mxu0 0.0
        %1832 = vmatpush1.msra.mxu0 0.0
        %1833 = vmatprep.subr.mxu0 0.0
        %1834 = vmatpush1.msra.mxu0 0.0
        %1835 = vmatprep.subr.mxu0 0.0
        %1836 = vmatpush1.msra.mxu0 0.0
        %1837 = vmatprep.subr.mxu0 0.0
        %1838 = vmatpush1.msra.mxu0 0.0
        %1839 = vmatprep.subr.mxu0 0.0
        %1840 = vmatpush1.msra.mxu0 0.0
        %1841 = vmatprep.subr.mxu0 0.0
        %1842 = vmatpush1.msra.mxu0 0.0
        %1843 = vmatprep.subr.mxu0 0.0
        %1844 = vmatpush1.msra.mxu0 0.0
        %1845 = vmatprep.subr.mxu0 0.0
        %1846 = vmatpush1.msra.mxu0 0.0
        %1847 = vmatprep.subr.mxu0 0.0
        %1848 = vmatpush1.msra.mxu0 0.0
        %1849 = vmatprep.subr.mxu0 0.0
        %1850 = vmatpush1.msra.mxu0 %v1702
        %1851 = vmatprep.subr.mxu0 0.0
        %1852 = vmatpush1.msra.mxu0 %v1696
        %1853 = vmatprep.subr.mxu0 0.0
        %1854 = vmatpush1.msra.mxu0 %v1690
        %1855 = vmatprep.subr.mxu0 0.0
        %1856 = vmatpush1.msra.mxu0 %v1684
        %1857 = vmatprep.subr.mxu0 0.0
        %1858 = vmatpush2.msra.mxu0 0.0
        %1859 = vmatprep.subr.mxu0 0.0
        %1860 = vmatpush2.msra.mxu0 0.0
        %1861 = vmatprep.subr.mxu0 0.0
        %1862 = vmatpush2.msra.mxu0 0.0
        %1863 = vmatprep.subr.mxu0 0.0
        %1864 = vmatpush2.msra.mxu0 0.0
        %1865 = vmatprep.subr.mxu0 0.0
        %1866 = vmatpush2.msra.mxu0 0.0
        %1867 = vmatprep.subr.mxu0 0.0
        %1868 = vmatpush2.msra.mxu0 0.0
        %1869 = vmatprep.subr.mxu0 0.0
        %1870 = vmatpush2.msra.mxu0 0.0
        %1871 = vmatprep.subr.mxu0 0.0
        %1872 = vmatpush2.msra.mxu0 0.0
        %1873 = vmatprep.subr.mxu0 0.0
        %1874 = vmatpush2.msra.mxu0 0.0
        %1875 = vmatprep.subr.mxu0 0.0
        %1876 = vmatpush2.msra.mxu0 0.0
        %1877 = vmatprep.subr.mxu0 0.0
        %1878 = vmatpush2.msra.mxu0 0.0
        %1879 = vmatprep.subr.mxu0 0.0
        %1880 = vmatpush2.msra.mxu0 0.0
        %1881 = vmatprep.subr.mxu0 0.0
        %1882 = vmatpush2.msra.mxu0 0.0
        %1883 = vmatprep.subr.mxu0 0.0
        %1884 = vmatpush2.msra.mxu0 0.0
        %1885 = vmatprep.subr.mxu0 0.0
        %1886 = vmatpush2.msra.mxu0 0.0
        %1887 = vmatprep.subr.mxu0 0.0
        %1888 = vmatpush2.msra.mxu0 0.0
        %1889 = vmatprep.mubr.f32.mxu0 0.0
        %1890 = vmatmul.mubr.f32.gmra.mxu0 %v1725
        %v1891 = vpop.f32.mrf.mxu0
        %v1892 = vadd.f32 0.0, %v1891
        %v1893 = vpop.f32.mrf.mxu0
        %1894 = vmatprep.mubr.f32.mxu0 0.0
        %1895 = vmatmul.mubr.f32.gmra.mxu0 %v1728
        %v1896 = vpop.f32.mrf.mxu0
        %v1897 = vadd.f32 0.0, %v1896
        %v1898 = vpop.f32.mrf.mxu0
        %1899 = vmatprep.mubr.f32.mxu0 0.0
        %1900 = vmatmul.mubr.f32.gmra.mxu0 %v1731
        %v1901 = vpop.f32.mrf.mxu0
        %v1902 = vadd.f32 0.0, %v1901
        %v1903 = vpop.f32.mrf.mxu0
        %1904 = vmatprep.mubr.f32.mxu0 0.0
        %1905 = vmatmul.mubr.f32.gmra.mxu0 %v1734
        %v1906 = vpop.f32.mrf.mxu0
        %v1907 = vadd.f32 0.0, %v1906
        %v1908 = vpop.f32.mrf.mxu0
        %1909 = vdwg.mxu0
        %v1910 = vadd.f32 %v1662, %v1803
        %v1911 = vadd.f32 %v1663, %v1805
        %v1912 = vadd.f32 %v1664, %v1892
        %v1913 = vadd.f32 %v1665, %v1809
        %v1914 = vadd.f32 %v1666, %v1811
        %v1915 = vadd.f32 %v1667, %v1897
        %v1916 = vadd.f32 %v1668, %v1815
        %v1917 = vadd.f32 %v1669, %v1817
        %v1918 = vadd.f32 %v1670, %v1902
        %v1919 = vadd.f32 %v1671, %v1821
        %v1920 = vadd.f32 %v1672, %v1823
        %v1921 = vadd.f32 %v1673, %v1907
        %s1922 = scalar_lea.vmem [#allocation5], 224
        %v1923 = vld [vmem:[%s1922] sm:$0xff]
        %v1924 = vld [vmem:[%s1922 + $0x8] sm:$0xff]
        %v1925 = vld [vmem:[%s1922 + $0x10] sm:$0xff]
        %v1926 = vld [vmem:[%s1922 + $0x18] sm:$0xff]
        %1927 = vrot.lane.b32.xlu0 %v231, 91
        %v1928 = vpop.permute.xlu0 %1927
        %1929 = vrot.lane.b32.xlu0 %v232, 91
        %v1930 = vpop.permute.xlu0 %1929
        %1931 = vrot.lane.b32.xlu0 %v233, 91
        %v1932 = vpop.permute.xlu0 %1931
        %1933 = vrot.lane.b32.xlu0 %v234, 91
        %v1934 = vpop.permute.xlu0 %1933
        %1935 = vrot.lane.b32.xlu0 %v235, 91
        %v1936 = vpop.permute.xlu0 %1935
        %1937 = vrot.lane.b32.xlu0 %v236, 91
        %v1938 = vpop.permute.xlu0 %1937
        %1939 = vrot.lane.b32.xlu0 %v237, 91
        %v1940 = vpop.permute.xlu0 %1939
        %1941 = vrot.lane.b32.xlu0 %v238, 91
        %v1942 = vpop.permute.xlu0 %1941
        %1943 = vrot.lane.b32.xlu0 %v239, 91
        %v1944 = vpop.permute.xlu0 %1943
        %1945 = vrot.lane.b32.xlu0 %v240, 91
        %v1946 = vpop.permute.xlu0 %1945
        %1947 = vrot.lane.b32.xlu0 %v241, 91
        %v1948 = vpop.permute.xlu0 %1947
        %1949 = vrot.lane.b32.xlu0 %v242, 91
        %v1950 = vpop.permute.xlu0 %1949
        %vm1951 = vcmask 744448
        %v1952 = vsel %vm1951, %v1928, %v1930
        %v1953 = vsel %vm1951, %v1930, %v1932
        %v1954 = vsel %vm1951, %v1934, %v1936
        %v1955 = vsel %vm1951, %v1936, %v1938
        %v1956 = vsel %vm1951, %v1940, %v1942
        %v1957 = vsel %vm1951, %v1942, %v1944
        %v1958 = vsel %vm1951, %v1946, %v1948
        %v1959 = vsel %vm1951, %v1948, %v1950
        %v1973 = vsel %vm309, %v1923, 0
        %v1976 = vsel %vm309, %v1924, 0
        %v1979 = vsel %vm309, %v1925, 0
        %v1982 = vsel %vm309, %v1926, 0
        %1984 = vmatprep.subr.mxu0 0.0
        %1985 = vmatpush1.msra.mxu0 0.0
        %1986 = vmatprep.subr.mxu0 0.0
        %1987 = vmatpush1.msra.mxu0 0.0
        %1988 = vmatprep.subr.mxu0 0.0
        %1989 = vmatpush1.msra.mxu0 0.0
        %1990 = vmatprep.subr.mxu0 0.0
        %1991 = vmatpush1.msra.mxu0 0.0
        %1992 = vmatprep.subr.mxu0 0.0
        %1993 = vmatpush1.msra.mxu0 0.0
        %1994 = vmatprep.subr.mxu0 0.0
        %1995 = vmatpush1.msra.mxu0 0.0
        %1996 = vmatprep.subr.mxu0 0.0
        %1997 = vmatpush1.msra.mxu0 0.0
        %1998 = vmatprep.subr.mxu0 0.0
        %1999 = vmatpush1.msra.mxu0 0.0
        %2000 = vmatprep.subr.mxu0 0.0
        %2001 = vmatpush1.msra.mxu0 0.0
        %2002 = vmatprep.subr.mxu0 0.0
        %2003 = vmatpush1.msra.mxu0 0.0
        %2004 = vmatprep.subr.mxu0 0.0
        %2005 = vmatpush1.msra.mxu0 0.0
        %2006 = vmatprep.subr.mxu0 0.0
        %2007 = vmatpush1.msra.mxu0 0.0
        %2008 = vmatprep.subr.mxu0 %v1959
        %2009 = vmatpush1.msra.mxu0 %v1958
        %2010 = vmatprep.subr.mxu0 %v1957
        %2011 = vmatpush1.msra.mxu0 %v1956
        %2012 = vmatprep.subr.mxu0 %v1955
        %2013 = vmatpush1.msra.mxu0 %v1954
        %2014 = vmatprep.subr.mxu0 %v1953
        %2015 = vmatpush1.msra.mxu0 %v1952
        %2016 = vmatprep.subr.mxu0 0.0
        %2017 = vmatpush2.msra.mxu0 0.0
        %2018 = vmatprep.subr.mxu0 0.0
        %2019 = vmatpush2.msra.mxu0 0.0
        %2020 = vmatprep.subr.mxu0 0.0
        %2021 = vmatpush2.msra.mxu0 0.0
        %2022 = vmatprep.subr.mxu0 0.0
        %2023 = vmatpush2.msra.mxu0 0.0
        %2024 = vmatprep.subr.mxu0 0.0
        %2025 = vmatpush2.msra.mxu0 0.0
        %2026 = vmatprep.subr.mxu0 0.0
        %2027 = vmatpush2.msra.mxu0 0.0
        %2028 = vmatprep.subr.mxu0 0.0
        %2029 = vmatpush2.msra.mxu0 0.0
        %2030 = vmatprep.subr.mxu0 0.0
        %2031 = vmatpush2.msra.mxu0 0.0
        %2032 = vmatprep.subr.mxu0 0.0
        %2033 = vmatpush2.msra.mxu0 0.0
        %2034 = vmatprep.subr.mxu0 0.0
        %2035 = vmatpush2.msra.mxu0 0.0
        %2036 = vmatprep.subr.mxu0 0.0
        %2037 = vmatpush2.msra.mxu0 0.0
        %2038 = vmatprep.subr.mxu0 0.0
        %2039 = vmatpush2.msra.mxu0 0.0
        %2040 = vmatprep.subr.mxu0 0.0
        %2041 = vmatpush2.msra.mxu0 0.0
        %2042 = vmatprep.subr.mxu0 0.0
        %2043 = vmatpush2.msra.mxu0 0.0
        %2044 = vmatprep.subr.mxu0 0.0
        %2045 = vmatpush2.msra.mxu0 0.0
        %2046 = vmatprep.subr.mxu0 0.0
        %2047 = vmatpush2.msra.mxu0 0.0
        %2048 = vmatprep.mubr.f32.mxu0 0.0
        %2049 = vmatmul.mubr.f32.gmra.mxu0 %v1973
        %v2050 = vpop.f32.mrf.mxu0
        %v2051 = vadd.f32 0.0, %v2050
        %v2052 = vpop.f32.mrf.mxu0
        %v2053 = vadd.f32 0.0, %v2052
        %2054 = vmatprep.mubr.f32.mxu0 0.0
        %2055 = vmatmul.mubr.f32.gmra.mxu0 %v1976
        %v2056 = vpop.f32.mrf.mxu0
        %v2057 = vadd.f32 0.0, %v2056
        %v2058 = vpop.f32.mrf.mxu0
        %v2059 = vadd.f32 0.0, %v2058
        %2060 = vmatprep.mubr.f32.mxu0 0.0
        %2061 = vmatmul.mubr.f32.gmra.mxu0 %v1979
        %v2062 = vpop.f32.mrf.mxu0
        %v2063 = vadd.f32 0.0, %v2062
        %v2064 = vpop.f32.mrf.mxu0
        %v2065 = vadd.f32 0.0, %v2064
        %2066 = vmatprep.mubr.f32.mxu0 0.0
        %2067 = vmatmul.mubr.f32.gmra.mxu0 %v1982
        %v2068 = vpop.f32.mrf.mxu0
        %v2069 = vadd.f32 0.0, %v2068
        %v2070 = vpop.f32.mrf.mxu0
        %v2071 = vadd.f32 0.0, %v2070
        %2072 = vdwg.mxu0
        %2073 = vmatprep.subr.mxu0 0.0
        %2074 = vmatpush1.msra.mxu0 0.0
        %2075 = vmatprep.subr.mxu0 0.0
        %2076 = vmatpush1.msra.mxu0 0.0
        %2077 = vmatprep.subr.mxu0 0.0
        %2078 = vmatpush1.msra.mxu0 0.0
        %2079 = vmatprep.subr.mxu0 0.0
        %2080 = vmatpush1.msra.mxu0 0.0
        %2081 = vmatprep.subr.mxu0 0.0
        %2082 = vmatpush1.msra.mxu0 0.0
        %2083 = vmatprep.subr.mxu0 0.0
        %2084 = vmatpush1.msra.mxu0 0.0
        %2085 = vmatprep.subr.mxu0 0.0
        %2086 = vmatpush1.msra.mxu0 0.0
        %2087 = vmatprep.subr.mxu0 0.0
        %2088 = vmatpush1.msra.mxu0 0.0
        %2089 = vmatprep.subr.mxu0 0.0
        %2090 = vmatpush1.msra.mxu0 0.0
        %2091 = vmatprep.subr.mxu0 0.0
        %2092 = vmatpush1.msra.mxu0 0.0
        %2093 = vmatprep.subr.mxu0 0.0
        %2094 = vmatpush1.msra.mxu0 0.0
        %2095 = vmatprep.subr.mxu0 0.0
        %2096 = vmatpush1.msra.mxu0 0.0
        %2097 = vmatprep.subr.mxu0 0.0
        %2098 = vmatpush1.msra.mxu0 %v1950
        %2099 = vmatprep.subr.mxu0 0.0
        %2100 = vmatpush1.msra.mxu0 %v1944
        %2101 = vmatprep.subr.mxu0 0.0
        %2102 = vmatpush1.msra.mxu0 %v1938
        %2103 = vmatprep.subr.mxu0 0.0
        %2104 = vmatpush1.msra.mxu0 %v1932
        %2105 = vmatprep.subr.mxu0 0.0
        %2106 = vmatpush2.msra.mxu0 0.0
        %2107 = vmatprep.subr.mxu0 0.0
        %2108 = vmatpush2.msra.mxu0 0.0
        %2109 = vmatprep.subr.mxu0 0.0
        %2110 = vmatpush2.msra.mxu0 0.0
        %2111 = vmatprep.subr.mxu0 0.0
        %2112 = vmatpush2.msra.mxu0 0.0
        %2113 = vmatprep.subr.mxu0 0.0
        %2114 = vmatpush2.msra.mxu0 0.0
        %2115 = vmatprep.subr.mxu0 0.0
        %2116 = vmatpush2.msra.mxu0 0.0
        %2117 = vmatprep.subr.mxu0 0.0
        %2118 = vmatpush2.msra.mxu0 0.0
        %2119 = vmatprep.subr.mxu0 0.0
        %2120 = vmatpush2.msra.mxu0 0.0
        %2121 = vmatprep.subr.mxu0 0.0
        %2122 = vmatpush2.msra.mxu0 0.0
        %2123 = vmatprep.subr.mxu0 0.0
        %2124 = vmatpush2.msra.mxu0 0.0
        %2125 = vmatprep.subr.mxu0 0.0
        %2126 = vmatpush2.msra.mxu0 0.0
        %2127 = vmatprep.subr.mxu0 0.0
        %2128 = vmatpush2.msra.mxu0 0.0
        %2129 = vmatprep.subr.mxu0 0.0
        %2130 = vmatpush2.msra.mxu0 0.0
        %2131 = vmatprep.subr.mxu0 0.0
        %2132 = vmatpush2.msra.mxu0 0.0
        %2133 = vmatprep.subr.mxu0 0.0
        %2134 = vmatpush2.msra.mxu0 0.0
        %2135 = vmatprep.subr.mxu0 0.0
        %2136 = vmatpush2.msra.mxu0 0.0
        %2137 = vmatprep.mubr.f32.mxu0 0.0
        %2138 = vmatmul.mubr.f32.gmra.mxu0 %v1973
        %v2139 = vpop.f32.mrf.mxu0
        %v2140 = vadd.f32 0.0, %v2139
        %v2141 = vpop.f32.mrf.mxu0
        %2142 = vmatprep.mubr.f32.mxu0 0.0
        %2143 = vmatmul.mubr.f32.gmra.mxu0 %v1976
        %v2144 = vpop.f32.mrf.mxu0
        %v2145 = vadd.f32 0.0, %v2144
        %v2146 = vpop.f32.mrf.mxu0
        %2147 = vmatprep.mubr.f32.mxu0 0.0
        %2148 = vmatmul.mubr.f32.gmra.mxu0 %v1979
        %v2149 = vpop.f32.mrf.mxu0
        %v2150 = vadd.f32 0.0, %v2149
        %v2151 = vpop.f32.mrf.mxu0
        %2152 = vmatprep.mubr.f32.mxu0 0.0
        %2153 = vmatmul.mubr.f32.gmra.mxu0 %v1982
        %v2154 = vpop.f32.mrf.mxu0
        %v2155 = vadd.f32 0.0, %v2154
        %v2156 = vpop.f32.mrf.mxu0
        %2157 = vdwg.mxu0
        %v2158 = vadd.f32 %v1910, %v2051
        %v2159 = vadd.f32 %v1911, %v2053
        %v2160 = vadd.f32 %v1912, %v2140
        %v2161 = vadd.f32 %v1913, %v2057
        %v2162 = vadd.f32 %v1914, %v2059
        %v2163 = vadd.f32 %v1915, %v2145
        %v2164 = vadd.f32 %v1916, %v2063
        %v2165 = vadd.f32 %v1917, %v2065
        %v2166 = vadd.f32 %v1918, %v2150
        %v2167 = vadd.f32 %v1919, %v2069
        %v2168 = vadd.f32 %v1920, %v2071
        %v2169 = vadd.f32 %v1921, %v2155
        %s2170 = scalar_lea.vmem [#allocation5], 256
        %v2171 = vld [vmem:[%s2170] sm:$0xff]
        %v2172 = vld [vmem:[%s2170 + $0x8] sm:$0xff]
        %v2173 = vld [vmem:[%s2170 + $0x10] sm:$0xff]
        %v2174 = vld [vmem:[%s2170 + $0x18] sm:$0xff]
        %2175 = vrot.lane.b32.xlu0 %v231, 90
        %v2176 = vpop.permute.xlu0 %2175
        %2177 = vrot.lane.b32.xlu0 %v232, 90
        %v2178 = vpop.permute.xlu0 %2177
        %2179 = vrot.lane.b32.xlu0 %v233, 90
        %v2180 = vpop.permute.xlu0 %2179
        %2181 = vrot.lane.b32.xlu0 %v234, 90
        %v2182 = vpop.permute.xlu0 %2181
        %2183 = vrot.lane.b32.xlu0 %v235, 90
        %v2184 = vpop.permute.xlu0 %2183
        %2185 = vrot.lane.b32.xlu0 %v236, 90
        %v2186 = vpop.permute.xlu0 %2185
        %2187 = vrot.lane.b32.xlu0 %v237, 90
        %v2188 = vpop.permute.xlu0 %2187
        %2189 = vrot.lane.b32.xlu0 %v238, 90
        %v2190 = vpop.permute.xlu0 %2189
        %2191 = vrot.lane.b32.xlu0 %v239, 90
        %v2192 = vpop.permute.xlu0 %2191
        %2193 = vrot.lane.b32.xlu0 %v240, 90
        %v2194 = vpop.permute.xlu0 %2193
        %2195 = vrot.lane.b32.xlu0 %v241, 90
        %v2196 = vpop.permute.xlu0 %2195
        %2197 = vrot.lane.b32.xlu0 %v242, 90
        %v2198 = vpop.permute.xlu0 %2197
        %vm2199 = vcmask 736256
        %v2200 = vsel %vm2199, %v2176, %v2178
        %v2201 = vsel %vm2199, %v2178, %v2180
        %v2202 = vsel %vm2199, %v2182, %v2184
        %v2203 = vsel %vm2199, %v2184, %v2186
        %v2204 = vsel %vm2199, %v2188, %v2190
        %v2205 = vsel %vm2199, %v2190, %v2192
        %v2206 = vsel %vm2199, %v2194, %v2196
        %v2207 = vsel %vm2199, %v2196, %v2198
        %v2221 = vsel %vm309, %v2171, 0
        %v2224 = vsel %vm309, %v2172, 0
        %v2227 = vsel %vm309, %v2173, 0
        %v2230 = vsel %vm309, %v2174, 0
        %2232 = vmatprep.subr.mxu0 0.0
        %2233 = vmatpush1.msra.mxu0 0.0
        %2234 = vmatprep.subr.mxu0 0.0
        %2235 = vmatpush1.msra.mxu0 0.0
        %2236 = vmatprep.subr.mxu0 0.0
        %2237 = vmatpush1.msra.mxu0 0.0
        %2238 = vmatprep.subr.mxu0 0.0
        %2239 = vmatpush1.msra.mxu0 0.0
        %2240 = vmatprep.subr.mxu0 0.0
        %2241 = vmatpush1.msra.mxu0 0.0
        %2242 = vmatprep.subr.mxu0 0.0
        %2243 = vmatpush1.msra.mxu0 0.0
        %2244 = vmatprep.subr.mxu0 0.0
        %2245 = vmatpush1.msra.mxu0 0.0
        %2246 = vmatprep.subr.mxu0 0.0
        %2247 = vmatpush1.msra.mxu0 0.0
        %2248 = vmatprep.subr.mxu0 0.0
        %2249 = vmatpush1.msra.mxu0 0.0
        %2250 = vmatprep.subr.mxu0 0.0
        %2251 = vmatpush1.msra.mxu0 0.0
        %2252 = vmatprep.subr.mxu0 0.0
        %2253 = vmatpush1.msra.mxu0 0.0
        %2254 = vmatprep.subr.mxu0 0.0
        %2255 = vmatpush1.msra.mxu0 0.0
        %2256 = vmatprep.subr.mxu0 %v2207
        %2257 = vmatpush1.msra.mxu0 %v2206
        %2258 = vmatprep.subr.mxu0 %v2205
        %2259 = vmatpush1.msra.mxu0 %v2204
        %2260 = vmatprep.subr.mxu0 %v2203
        %2261 = vmatpush1.msra.mxu0 %v2202
        %2262 = vmatprep.subr.mxu0 %v2201
        %2263 = vmatpush1.msra.mxu0 %v2200
        %2264 = vmatprep.subr.mxu0 0.0
        %2265 = vmatpush2.msra.mxu0 0.0
        %2266 = vmatprep.subr.mxu0 0.0
        %2267 = vmatpush2.msra.mxu0 0.0
        %2268 = vmatprep.subr.mxu0 0.0
        %2269 = vmatpush2.msra.mxu0 0.0
        %2270 = vmatprep.subr.mxu0 0.0
        %2271 = vmatpush2.msra.mxu0 0.0
        %2272 = vmatprep.subr.mxu0 0.0
        %2273 = vmatpush2.msra.mxu0 0.0
        %2274 = vmatprep.subr.mxu0 0.0
        %2275 = vmatpush2.msra.mxu0 0.0
        %2276 = vmatprep.subr.mxu0 0.0
        %2277 = vmatpush2.msra.mxu0 0.0
        %2278 = vmatprep.subr.mxu0 0.0
        %2279 = vmatpush2.msra.mxu0 0.0
        %2280 = vmatprep.subr.mxu0 0.0
        %2281 = vmatpush2.msra.mxu0 0.0
        %2282 = vmatprep.subr.mxu0 0.0
        %2283 = vmatpush2.msra.mxu0 0.0
        %2284 = vmatprep.subr.mxu0 0.0
        %2285 = vmatpush2.msra.mxu0 0.0
        %2286 = vmatprep.subr.mxu0 0.0
        %2287 = vmatpush2.msra.mxu0 0.0
        %2288 = vmatprep.subr.mxu0 0.0
        %2289 = vmatpush2.msra.mxu0 0.0
        %2290 = vmatprep.subr.mxu0 0.0
        %2291 = vmatpush2.msra.mxu0 0.0
        %2292 = vmatprep.subr.mxu0 0.0
        %2293 = vmatpush2.msra.mxu0 0.0
        %2294 = vmatprep.subr.mxu0 0.0
        %2295 = vmatpush2.msra.mxu0 0.0
        %2296 = vmatprep.mubr.f32.mxu0 0.0
        %2297 = vmatmul.mubr.f32.gmra.mxu0 %v2221
        %v2298 = vpop.f32.mrf.mxu0
        %v2299 = vadd.f32 0.0, %v2298
        %v2300 = vpop.f32.mrf.mxu0
        %v2301 = vadd.f32 0.0, %v2300
        %2302 = vmatprep.mubr.f32.mxu0 0.0
        %2303 = vmatmul.mubr.f32.gmra.mxu0 %v2224
        %v2304 = vpop.f32.mrf.mxu0
        %v2305 = vadd.f32 0.0, %v2304
        %v2306 = vpop.f32.mrf.mxu0
        %v2307 = vadd.f32 0.0, %v2306
        %2308 = vmatprep.mubr.f32.mxu0 0.0
        %2309 = vmatmul.mubr.f32.gmra.mxu0 %v2227
        %v2310 = vpop.f32.mrf.mxu0
        %v2311 = vadd.f32 0.0, %v2310
        %v2312 = vpop.f32.mrf.mxu0
        %v2313 = vadd.f32 0.0, %v2312
        %2314 = vmatprep.mubr.f32.mxu0 0.0
        %2315 = vmatmul.mubr.f32.gmra.mxu0 %v2230
        %v2316 = vpop.f32.mrf.mxu0
        %v2317 = vadd.f32 0.0, %v2316
        %v2318 = vpop.f32.mrf.mxu0
        %v2319 = vadd.f32 0.0, %v2318
        %2320 = vdwg.mxu0
        %2321 = vmatprep.subr.mxu0 0.0
        %2322 = vmatpush1.msra.mxu0 0.0
        %2323 = vmatprep.subr.mxu0 0.0
        %2324 = vmatpush1.msra.mxu0 0.0
        %2325 = vmatprep.subr.mxu0 0.0
        %2326 = vmatpush1.msra.mxu0 0.0
        %2327 = vmatprep.subr.mxu0 0.0
        %2328 = vmatpush1.msra.mxu0 0.0
        %2329 = vmatprep.subr.mxu0 0.0
        %2330 = vmatpush1.msra.mxu0 0.0
        %2331 = vmatprep.subr.mxu0 0.0
        %2332 = vmatpush1.msra.mxu0 0.0
        %2333 = vmatprep.subr.mxu0 0.0
        %2334 = vmatpush1.msra.mxu0 0.0
        %2335 = vmatprep.subr.mxu0 0.0
        %2336 = vmatpush1.msra.mxu0 0.0
        %2337 = vmatprep.subr.mxu0 0.0
        %2338 = vmatpush1.msra.mxu0 0.0
        %2339 = vmatprep.subr.mxu0 0.0
        %2340 = vmatpush1.msra.mxu0 0.0
        %2341 = vmatprep.subr.mxu0 0.0
        %2342 = vmatpush1.msra.mxu0 0.0
        %2343 = vmatprep.subr.mxu0 0.0
        %2344 = vmatpush1.msra.mxu0 0.0
        %2345 = vmatprep.subr.mxu0 0.0
        %2346 = vmatpush1.msra.mxu0 %v2198
        %2347 = vmatprep.subr.mxu0 0.0
        %2348 = vmatpush1.msra.mxu0 %v2192
        %2349 = vmatprep.subr.mxu0 0.0
        %2350 = vmatpush1.msra.mxu0 %v2186
        %2351 = vmatprep.subr.mxu0 0.0
        %2352 = vmatpush1.msra.mxu0 %v2180
        %2353 = vmatprep.subr.mxu0 0.0
        %2354 = vmatpush2.msra.mxu0 0.0
        %2355 = vmatprep.subr.mxu0 0.0
        %2356 = vmatpush2.msra.mxu0 0.0
        %2357 = vmatprep.subr.mxu0 0.0
        %2358 = vmatpush2.msra.mxu0 0.0
        %2359 = vmatprep.subr.mxu0 0.0
        %2360 = vmatpush2.msra.mxu0 0.0
        %2361 = vmatprep.subr.mxu0 0.0
        %2362 = vmatpush2.msra.mxu0 0.0
        %2363 = vmatprep.subr.mxu0 0.0
        %2364 = vmatpush2.msra.mxu0 0.0
        %2365 = vmatprep.subr.mxu0 0.0
        %2366 = vmatpush2.msra.mxu0 0.0
        %2367 = vmatprep.subr.mxu0 0.0
        %2368 = vmatpush2.msra.mxu0 0.0
        %2369 = vmatprep.subr.mxu0 0.0
        %2370 = vmatpush2.msra.mxu0 0.0
        %2371 = vmatprep.subr.mxu0 0.0
        %2372 = vmatpush2.msra.mxu0 0.0
        %2373 = vmatprep.subr.mxu0 0.0
        %2374 = vmatpush2.msra.mxu0 0.0
        %2375 = vmatprep.subr.mxu0 0.0
        %2376 = vmatpush2.msra.mxu0 0.0
        %2377 = vmatprep.subr.mxu0 0.0
        %2378 = vmatpush2.msra.mxu0 0.0
        %2379 = vmatprep.subr.mxu0 0.0
        %2380 = vmatpush2.msra.mxu0 0.0
        %2381 = vmatprep.subr.mxu0 0.0
        %2382 = vmatpush2.msra.mxu0 0.0
        %2383 = vmatprep.subr.mxu0 0.0
        %2384 = vmatpush2.msra.mxu0 0.0
        %2385 = vmatprep.mubr.f32.mxu0 0.0
        %2386 = vmatmul.mubr.f32.gmra.mxu0 %v2221
        %v2387 = vpop.f32.mrf.mxu0
        %v2388 = vadd.f32 0.0, %v2387
        %v2389 = vpop.f32.mrf.mxu0
        %2390 = vmatprep.mubr.f32.mxu0 0.0
        %2391 = vmatmul.mubr.f32.gmra.mxu0 %v2224
        %v2392 = vpop.f32.mrf.mxu0
        %v2393 = vadd.f32 0.0, %v2392
        %v2394 = vpop.f32.mrf.mxu0
        %2395 = vmatprep.mubr.f32.mxu0 0.0
        %2396 = vmatmul.mubr.f32.gmra.mxu0 %v2227
        %v2397 = vpop.f32.mrf.mxu0
        %v2398 = vadd.f32 0.0, %v2397
        %v2399 = vpop.f32.mrf.mxu0
        %2400 = vmatprep.mubr.f32.mxu0 0.0
        %2401 = vmatmul.mubr.f32.gmra.mxu0 %v2230
        %v2402 = vpop.f32.mrf.mxu0
        %v2403 = vadd.f32 0.0, %v2402
        %v2404 = vpop.f32.mrf.mxu0
        %2405 = vdwg.mxu0
        %v2406 = vadd.f32 %v2158, %v2299
        %v2407 = vadd.f32 %v2159, %v2301
        %v2408 = vadd.f32 %v2160, %v2388
        %v2409 = vadd.f32 %v2161, %v2305
        %v2410 = vadd.f32 %v2162, %v2307
        %v2411 = vadd.f32 %v2163, %v2393
        %v2412 = vadd.f32 %v2164, %v2311
        %v2413 = vadd.f32 %v2165, %v2313
        %v2414 = vadd.f32 %v2166, %v2398
        %v2415 = vadd.f32 %v2167, %v2317
        %v2416 = vadd.f32 %v2168, %v2319
        %v2417 = vadd.f32 %v2169, %v2403
        %v2418 = vld [vmem:[%s2] sm:$0xff]
        %v2419 = vld [vmem:[%s2 + $0x8] sm:$0xff]
        %v2420 = vld [vmem:[%s2 + $0x10] sm:$0xff]
        %v2421 = vld [vmem:[%s2 + $0x18] sm:$0xff]
        %2423 = vset.pattern.permute.xlu0 0
        %2424 = vperm.xlu0 %2423, %v2418
        %v2425 = vpop.permute.xlu0 %2424
        %2428 = vset.pattern.permute.xlu0 0
        %2429 = vperm.xlu0 %2428, %v2419
        %v2430 = vpop.permute.xlu0 %2429
        %2433 = vset.pattern.permute.xlu0 0
        %2434 = vperm.xlu0 %2433, %v2420
        %v2435 = vpop.permute.xlu0 %2434
        %2438 = vset.pattern.permute.xlu0 0
        %2439 = vperm.xlu0 %2438, %v2421
        %v2440 = vpop.permute.xlu0 %2439
        %v2442 = vadd.f32 %v2406, %v2425
        %v2443 = vadd.f32 %v2407, %v2425
        %v2444 = vadd.f32 %v2408, %v2425
        %v2445 = vadd.f32 %v2409, %v2430
        %v2446 = vadd.f32 %v2410, %v2430
        %v2447 = vadd.f32 %v2411, %v2430
        %v2448 = vadd.f32 %v2412, %v2435
        %v2449 = vadd.f32 %v2413, %v2435
        %v2450 = vadd.f32 %v2414, %v2435
        %v2451 = vadd.f32 %v2415, %v2440
        %v2452 = vadd.f32 %v2416, %v2440
        %v2453 = vadd.f32 %v2417, %v2440
        %v2454 = vmax.f32 %v2442, 0.0
        %v2455 = vmax.f32 %v2443, 0.0
        %v2456 = vmax.f32 %v2444, 0.0
        %v2457 = vmax.f32 %v2445, 0.0
        %v2458 = vmax.f32 %v2446, 0.0
        %v2459 = vmax.f32 %v2447, 0.0
        %v2460 = vmax.f32 %v2448, 0.0
        %v2461 = vmax.f32 %v2449, 0.0
        %v2462 = vmax.f32 %v2450, 0.0
        %v2463 = vmax.f32 %v2451, 0.0
        %v2464 = vmax.f32 %v2452, 0.0
        %v2465 = vmax.f32 %v2453, 0.0
        %v2466 = vld [vmem:[%s3] sm:$0xff]
        %v2468 = vsel %vm309, %v2466, 0
        %2470 = vmatprep.subr.mxu0 0.0
        %2471 = vmatpush1.msra.mxu0 0.0
        %2472 = vmatprep.subr.mxu0 0.0
        %2473 = vmatpush1.msra.mxu0 0.0
        %2474 = vmatprep.subr.mxu0 0.0
        %2475 = vmatpush1.msra.mxu0 0.0
        %2476 = vmatprep.subr.mxu0 0.0
        %2477 = vmatpush1.msra.mxu0 0.0
        %2478 = vmatprep.subr.mxu0 0.0
        %2479 = vmatpush1.msra.mxu0 0.0
        %2480 = vmatprep.subr.mxu0 0.0
        %2481 = vmatpush1.msra.mxu0 0.0
        %2482 = vmatprep.subr.mxu0 0.0
        %2483 = vmatpush1.msra.mxu0 0.0
        %2484 = vmatprep.subr.mxu0 0.0
        %2485 = vmatpush1.msra.mxu0 0.0
        %2486 = vmatprep.subr.mxu0 0.0
        %2487 = vmatpush1.msra.mxu0 0.0
        %2488 = vmatprep.subr.mxu0 0.0
        %2489 = vmatpush1.msra.mxu0 0.0
        %2490 = vmatprep.subr.mxu0 0.0
        %2491 = vmatpush1.msra.mxu0 0.0
        %2492 = vmatprep.subr.mxu0 0.0
        %2493 = vmatpush1.msra.mxu0 0.0
        %2494 = vmatprep.subr.mxu0 %v2464
        %2495 = vmatpush1.msra.mxu0 %v2463
        %2496 = vmatprep.subr.mxu0 %v2461
        %2497 = vmatpush1.msra.mxu0 %v2460
        %2498 = vmatprep.subr.mxu0 %v2458
        %2499 = vmatpush1.msra.mxu0 %v2457
        %2500 = vmatprep.subr.mxu0 %v2455
        %2501 = vmatpush1.msra.mxu0 %v2454
        %2502 = vmatprep.subr.mxu0 0.0
        %2503 = vmatpush2.msra.mxu0 0.0
        %2504 = vmatprep.subr.mxu0 0.0
        %2505 = vmatpush2.msra.mxu0 0.0
        %2506 = vmatprep.subr.mxu0 0.0
        %2507 = vmatpush2.msra.mxu0 0.0
        %2508 = vmatprep.subr.mxu0 0.0
        %2509 = vmatpush2.msra.mxu0 0.0
        %2510 = vmatprep.subr.mxu0 0.0
        %2511 = vmatpush2.msra.mxu0 0.0
        %2512 = vmatprep.subr.mxu0 0.0
        %2513 = vmatpush2.msra.mxu0 0.0
        %2514 = vmatprep.subr.mxu0 0.0
        %2515 = vmatpush2.msra.mxu0 0.0
        %2516 = vmatprep.subr.mxu0 0.0
        %2517 = vmatpush2.msra.mxu0 0.0
        %2518 = vmatprep.subr.mxu0 0.0
        %2519 = vmatpush2.msra.mxu0 0.0
        %2520 = vmatprep.subr.mxu0 0.0
        %2521 = vmatpush2.msra.mxu0 0.0
        %2522 = vmatprep.subr.mxu0 0.0
        %2523 = vmatpush2.msra.mxu0 0.0
        %2524 = vmatprep.subr.mxu0 0.0
        %2525 = vmatpush2.msra.mxu0 0.0
        %2526 = vmatprep.subr.mxu0 0.0
        %2527 = vmatpush2.msra.mxu0 0.0
        %2528 = vmatprep.subr.mxu0 0.0
        %2529 = vmatpush2.msra.mxu0 0.0
        %2530 = vmatprep.subr.mxu0 0.0
        %2531 = vmatpush2.msra.mxu0 0.0
        %2532 = vmatprep.subr.mxu0 0.0
        %2533 = vmatpush2.msra.mxu0 0.0
        %2534 = vmatprep.mubr.f32.mxu0 0.0
        %2535 = vmatmul.mubr.f32.gmra.mxu0 %v2468
        %v2536 = vpop.f32.mrf.mxu0
        %v2537 = vadd.f32 0.0, %v2536
        %v2538 = vpop.f32.mrf.mxu0
        %v2539 = vadd.f32 0.0, %v2538
        %2540 = vdwg.mxu0
        %2541 = vmatprep.subr.mxu0 0.0
        %2542 = vmatpush1.msra.mxu0 0.0
        %2543 = vmatprep.subr.mxu0 0.0
        %2544 = vmatpush1.msra.mxu0 0.0
        %2545 = vmatprep.subr.mxu0 0.0
        %2546 = vmatpush1.msra.mxu0 0.0
        %2547 = vmatprep.subr.mxu0 0.0
        %2548 = vmatpush1.msra.mxu0 0.0
        %2549 = vmatprep.subr.mxu0 0.0
        %2550 = vmatpush1.msra.mxu0 0.0
        %2551 = vmatprep.subr.mxu0 0.0
        %2552 = vmatpush1.msra.mxu0 0.0
        %2553 = vmatprep.subr.mxu0 0.0
        %2554 = vmatpush1.msra.mxu0 0.0
        %2555 = vmatprep.subr.mxu0 0.0
        %2556 = vmatpush1.msra.mxu0 0.0
        %2557 = vmatprep.subr.mxu0 0.0
        %2558 = vmatpush1.msra.mxu0 0.0
        %2559 = vmatprep.subr.mxu0 0.0
        %2560 = vmatpush1.msra.mxu0 0.0
        %2561 = vmatprep.subr.mxu0 0.0
        %2562 = vmatpush1.msra.mxu0 0.0
        %2563 = vmatprep.subr.mxu0 0.0
        %2564 = vmatpush1.msra.mxu0 0.0
        %2565 = vmatprep.subr.mxu0 0.0
        %2566 = vmatpush1.msra.mxu0 %v2465
        %2567 = vmatprep.subr.mxu0 0.0
        %2568 = vmatpush1.msra.mxu0 %v2462
        %2569 = vmatprep.subr.mxu0 0.0
        %2570 = vmatpush1.msra.mxu0 %v2459
        %2571 = vmatprep.subr.mxu0 0.0
        %2572 = vmatpush1.msra.mxu0 %v2456
        %2573 = vmatprep.subr.mxu0 0.0
        %2574 = vmatpush2.msra.mxu0 0.0
        %2575 = vmatprep.subr.mxu0 0.0
        %2576 = vmatpush2.msra.mxu0 0.0
        %2577 = vmatprep.subr.mxu0 0.0
        %2578 = vmatpush2.msra.mxu0 0.0
        %2579 = vmatprep.subr.mxu0 0.0
        %2580 = vmatpush2.msra.mxu0 0.0
        %2581 = vmatprep.subr.mxu0 0.0
        %2582 = vmatpush2.msra.mxu0 0.0
        %2583 = vmatprep.subr.mxu0 0.0
        %2584 = vmatpush2.msra.mxu0 0.0
        %2585 = vmatprep.subr.mxu0 0.0
        %2586 = vmatpush2.msra.mxu0 0.0
        %2587 = vmatprep.subr.mxu0 0.0
        %2588 = vmatpush2.msra.mxu0 0.0
        %2589 = vmatprep.subr.mxu0 0.0
        %2590 = vmatpush2.msra.mxu0 0.0
        %2591 = vmatprep.subr.mxu0 0.0
        %2592 = vmatpush2.msra.mxu0 0.0
        %2593 = vmatprep.subr.mxu0 0.0
        %2594 = vmatpush2.msra.mxu0 0.0
        %2595 = vmatprep.subr.mxu0 0.0
        %2596 = vmatpush2.msra.mxu0 0.0
        %2597 = vmatprep.subr.mxu0 0.0
        %2598 = vmatpush2.msra.mxu0 0.0
        %2599 = vmatprep.subr.mxu0 0.0
        %2600 = vmatpush2.msra.mxu0 0.0
        %2601 = vmatprep.subr.mxu0 0.0
        %2602 = vmatpush2.msra.mxu0 0.0
        %2603 = vmatprep.subr.mxu0 0.0
        %2604 = vmatpush2.msra.mxu0 0.0
        %2605 = vmatprep.mubr.f32.mxu0 0.0
        %2606 = vmatmul.mubr.f32.gmra.mxu0 %v2468
        %v2607 = vpop.f32.mrf.mxu0
        %v2608 = vadd.f32 0.0, %v2607
        %v2609 = vpop.f32.mrf.mxu0
        %2610 = vdwg.mxu0
        %2611 = vst [vmem:[%s230] sm:$0xff] %v2537
        %2612 = vst [vmem:[%s230 + $0x8] sm:$0xff] %v2539
        %2613 = vst.msk [vmem:[%s230 + $0x10] sm:$0xff] %vm309, %v2608
        %s2614 = sand.u32 %s119, 1
        %s2615 = scalar_lea.sflag [#allocation4], %s2614
        %s2616 = sand.u32 %s119, 1
        %s2617 = smul.addr %s2616, 24
        %s2618 = scalar_lea.vmem [#allocation7], %s2617
        // Predicated region
        $region45: #{tpu_custom_call.1} parent=35 // pred_check
          %p2619 = pneg %p129
        $region46: #{tpu_custom_call.1} parent=35 // pred_check_branch
          %2621 = sbr.rel (%p2619) target = $region48
        $region47: #{tpu_custom_call.1} parent=35 // pred_region
          %s2623 = ssub.s32 384, 384
          %2624 = vsyncadd %s2615, %s2623
          %s2625 = smul.addr %s22, 3
          %s2626 = smul.addr %s2625, 128
          %s2627 = scalar_lea.hbm %s4, %s2626
          %s2629 = sshll.u32 %s2618, 4
          %s2630 = int_to_ptr.vmem [resolvable:$true] %s2629
          %2632 = dma.vmem_to_hbm [thread:$0]  %s2630, 384, %s2627, %s2615
        $region48: #{tpu_custom_call.1} parent=35 // pred_fallthru
          _
      $region36: #{tpu_custom_call.1} parent=5 // pred_fallthru
        _
      %p2633 = scmp.le.s32.totalorder 2, %s17
      // Predicated region
      $region49: #{tpu_custom_call.1} parent=5 // pred_check
        %p2634 = pneg %p2633
      $region50: #{tpu_custom_call.1} parent=5 // pred_check_branch
        %2636 = sbr.rel (%p2634) target = $region52
      $region51: #{tpu_custom_call.1} parent=5 // pred_region
        %s2637 = ssub.s32 %s17, 2
        // Predicated region
        $region53: #{tpu_custom_call.1} parent=51 // pred_check
          %p2638 = pneg %p135
        $region54: #{tpu_custom_call.1} parent=51 // pred_check_branch
          %2640 = sbr.rel (%p2638) target = $region56
        $region55: #{tpu_custom_call.1} parent=51 // pred_region
          %s2641 = sand.u32 %s120, 1
          %s2642 = scalar_lea.sflag [#allocation4], %s2641
          %s2643 = sand.u32 %s120, 1
          %s2644 = smul.addr %s2643, 24
          %s2645 = scalar_lea.vmem [#allocation7], %s2644
          %2646 = dma.done %s2642, 384
        $region56: #{tpu_custom_call.1} parent=51 // pred_fallthru
          _
      $region52: #{tpu_custom_call.1} parent=5 // pred_fallthru
        _
    $region6: #{tpu_custom_call.1} parent=1 // loop_footer
      %s21 = sadd.s32 1, %s17
    $region7: #{tpu_custom_call.1} parent=1 // loop_footer_branch
      %16 = sbr.rel target = $region3
    $region8: #{tpu_custom_call.1} parent=1 // loop_exit
      _
    %2647 = vsyncpa [#allocation3], 1
    %s2648 = scalar_lea.sflag [#allocation3], 1
    %2649 = vsyncpa %s2648, 1
    %2650 = vsyncpa [#allocation6], 1
    %2651 = vsyncpa [#allocation4], 1
    %s2652 = scalar_lea.sflag [#allocation4], 1
    %2653 = vsyncpa %s2652, 1

</llo_original>
